<compile_context>
chip_gen: v5e
topology: v5e:2x2
jax: 0.10.0
libtpu: 0.0.40
codegen_flags: <defaults>
</compile_context>

<pallas_src>
import functools

import jax
import jax.numpy as jnp
import numpy as np
from jax.experimental import pallas as pl
from jax.experimental.pallas import tpu as pltpu

LANE = 128
TEXT_IN = 768
KG_IN = 300
KG_IN_PAD = 384            # 300 padded up to the next multiple of 128
MAX_TILE_B = 512           # batch tile rows (sweep 512-1024 for very large B)
MAX_TILE_KG = 512          # KG tile rows (keeps resident KG VMEM small on v5e)


def _round_up(x, m):
    return (x + m - 1) // m * m


# --------------------------------------------------------------------------- #
# Kernel 1: batch-invariant KG branch -> kg_pooled [1, Hp]
# --------------------------------------------------------------------------- #
def kg_pool_kernel(kg_ref, wk_ref, bk_ref, wa_ref, ba_ref, out_ref, acc_ref,
                   *, n_kg, tile_n):
    step = pl.program_id(0)

    @pl.when(step == 0)
    def _():
        acc_ref[...] = jnp.zeros_like(acc_ref)

    # relu(kg @ Wk + bk)   (bf16 MXU operands, f32 accumulate)
    kg_f = jnp.maximum(
        jnp.dot(kg_ref[...], wk_ref[...], preferred_element_type=jnp.float32)
        + bk_ref[...], 0.0)                                          # [tile_n, Hp] f32

    # attention: sigmoid(kg_f @ w_att + b_att) as a lane reduction
    att = jax.nn.sigmoid(
        jnp.sum(kg_f * wa_ref[...], axis=-1, keepdims=True) + ba_ref[...])  # [tile_n, 1]

    # mask out zero-padded KG rows (relu(bk) is nonzero there)
    row = step * tile_n + jax.lax.broadcasted_iota(jnp.int32, (tile_n, 1), 0)
    valid = (row < n_kg).astype(jnp.float32)

    acc_ref[...] += jnp.sum(kg_f * (att * valid), axis=0, keepdims=True)

    @pl.when(step == pl.num_programs(0) - 1)
    def _():
        out_ref[...] = acc_ref[...] * (1.0 / n_kg)                   # true-N mean pool


# --------------------------------------------------------------------------- #
# Kernel 2: batch-tiled text branch + fusion + LayerNorm + classifier
# --------------------------------------------------------------------------- #
def classify_kernel(text_ref, kgp_ref,
                    wt_ref, bt_ref,              # text_linear : [768, Hp] bf16, [1, Hp] f32
                    wft_ref, wfk_ref, bf_ref,    # fusion      : [Hp, Hp] bf16 x2, [1, Hp] f32
                    g_ref, beta_ref,             # layer_norm  : [1, Hp] f32, [1, Hp] f32
                    wc_ref, bc_ref,              # classifier  : [Hp, Lp] bf16, [1, Lp] f32
                    out_ref,                     # logits      : [tile_b, Lp] bf16
                    *, h_true):
    h_pad = wt_ref.shape[1]

    # text branch: relu(text @ Wt + bt)
    text_f = jnp.maximum(
        jnp.dot(text_ref[...], wt_ref[...], preferred_element_type=jnp.float32)
        + bt_ref[...], 0.0)                                          # [tB, Hp] f32

    # fusion: relu(text_f @ Wf_text + kg_pooled @ Wf_kg + bf)
    # (Wf pre-split host-side; concat never materializes; kg term broadcasts over batch)
    fused = jnp.maximum(
        jnp.dot(text_f.astype(jnp.bfloat16), wft_ref[...],
                preferred_element_type=jnp.float32)
        + jnp.dot(kgp_ref[...].astype(jnp.bfloat16), wfk_ref[...],
                  preferred_element_type=jnp.float32)
        + bf_ref[...], 0.0)                                          # [tB, Hp] f32
    # dropout: inference mode -> identity

    # LayerNorm over the TRUE hidden dim (padded lanes of `fused` are exactly 0,
    # but centered padded lanes would be -mean, so mask them out of the variance).
    inv_h = 1.0 / h_true
    mean = jnp.sum(fused, axis=-1, keepdims=True) * inv_h
    lane = jax.lax.broadcasted_iota(jnp.int32, (1, h_pad), 1)
    lane_mask = (lane < h_true).astype(jnp.float32)
    centered = (fused - mean) * lane_mask
    var = jnp.sum(centered * centered, axis=-1, keepdims=True) * inv_h
    scale = jax.lax.rsqrt(var + 1e-5) * g_ref[...]                   # gamma folded in
    normed = centered * scale + beta_ref[...]                        # [tB, Hp] f32

    # classifier: lane-dense padded bf16 slab
    out_ref[...] = (jnp.dot(normed.astype(jnp.bfloat16), wc_ref[...],
                            preferred_element_type=jnp.float32)
                    + bc_ref[...]).astype(out_ref.dtype)             # [tB, Lp]


# --------------------------------------------------------------------------- #
# One-time parameter preparation (pad to 128 lanes, bf16 MXU weights)
# --------------------------------------------------------------------------- #
def prepare_params(params, num_labels):
    h = params["wt"].shape[1]
    h_pad = _round_up(h, LANE)
    l_pad = _round_up(num_labels, LANE)

    def pad2(a, rows, cols, dtype):
        a = a.astype(dtype)
        return jnp.pad(a, ((0, rows - a.shape[0]), (0, cols - a.shape[1])))

    prep = dict(
        wt=pad2(params["wt"], TEXT_IN, h_pad, jnp.bfloat16),
        bt=pad2(params["bt"], 1, h_pad, jnp.float32),
        wk=pad2(params["wk"], KG_IN_PAD, h_pad, jnp.bfloat16),
        bk=pad2(params["bk"], 1, h_pad, jnp.float32),
        wa=pad2(params["wa"], 1, h_pad, jnp.float32),
        ba=params["ba"].astype(jnp.float32),
        wft=pad2(params["wf"][:h, :], h_pad, h_pad, jnp.bfloat16),
        wfk=pad2(params["wf"][h:, :], h_pad, h_pad, jnp.bfloat16),
        bf=pad2(params["bf"], 1, h_pad, jnp.float32),
        gamma=pad2(params["gamma"], 1, h_pad, jnp.float32),
        beta=pad2(params["beta"], 1, h_pad, jnp.float32),
        wc=pad2(params["wc"], h_pad, l_pad, jnp.bfloat16),
        bc=pad2(params["bc"], 1, l_pad, jnp.float32),
    )
    return prep, h, h_pad, l_pad


def make_classify_fn(params, num_labels):
    prep, h_true, h_pad, l_pad = prepare_params(params, num_labels)
    const2 = lambda i: (0, 0)

    def forward(text_features, kg_vectors):
        if kg_vectors.ndim == 1:                       # mirrors kg_vectors.unsqueeze(0)
            kg_vectors = kg_vectors[None, :]
        B = text_features.shape[0]
        n_kg = kg_vectors.shape[0]

        # ---- batch tiling: big tiles, but >= 2 grid steps once B > 32 (v7x cores) ----
        if B <= 32:
            tile_b = _round_up(B, 16)
        else:
            tile_b = min(MAX_TILE_B, _round_up((B + 1) // 2, 16))
        b_pad = _round_up(B, tile_b)

        # Activations: cast only if needed (accept bf16 from the producer), pad only
        # the ragged tail.
        text_bf = (text_features if text_features.dtype == jnp.bfloat16
                   else text_features.astype(jnp.bfloat16))
        if b_pad != B:
            text_bf = jnp.pad(text_bf, ((0, b_pad - B), (0, 0)))

        # ---- KG tiling (bf16 host-side; rows masked in-kernel) ----
        tile_n = min(MAX_TILE_KG, _round_up(n_kg, 16))
        n_pad = _round_up(n_kg, tile_n)
        kg_bf = jnp.pad(kg_vectors.astype(jnp.bfloat16),
                        ((0, n_pad - n_kg), (0, KG_IN_PAD - kg_vectors.shape[1])))

        # ---- kernel 1: kg_pooled [1, Hp] (computed once, batch-invariant) ----
        kg_pooled = pl.pallas_call(
            functools.partial(kg_pool_kernel, n_kg=n_kg, tile_n=tile_n),
            out_shape=jax.ShapeDtypeStruct((1, h_pad), jnp.float32),
            grid=(n_pad // tile_n,),
            in_specs=[
                pl.BlockSpec((tile_n, KG_IN_PAD), lambda i: (i, 0)),   # kg (tiled)
                pl.BlockSpec((KG_IN_PAD, h_pad), const2),              # wk
                pl.BlockSpec((1, h_pad), const2),                      # bk
                pl.BlockSpec((1, h_pad), const2),                      # wa
                pl.BlockSpec((1, 1), const2),                          # ba
            ],
            out_specs=pl.BlockSpec((1, h_pad), const2),
            scratch_shapes=[pltpu.VMEM((1, h_pad), jnp.float32)],
            compiler_params=pltpu.CompilerParams(
                dimension_semantics=("arbitrary",)),
        )(kg_bf, prep["wk"], prep["bk"], prep["wa"], prep["ba"])

        # ---- kernel 2: batch-tiled classify ----
        out_pad = pl.pallas_call(
            functools.partial(classify_kernel, h_true=h_true),
            out_shape=jax.ShapeDtypeStruct((b_pad, l_pad), jnp.bfloat16),
            grid=(b_pad // tile_b,),
            in_specs=[
                pl.BlockSpec((tile_b, TEXT_IN), lambda i: (i, 0)),     # text (tiled)
                pl.BlockSpec((1, h_pad), const2),                      # kg_pooled
                pl.BlockSpec((TEXT_IN, h_pad), const2),                # wt
                pl.BlockSpec((1, h_pad), const2),                      # bt
                pl.BlockSpec((h_pad, h_pad), const2),                  # wf (text half)
                pl.BlockSpec((h_pad, h_pad), const2),                  # wf (kg half)
                pl.BlockSpec((1, h_pad), const2),                      # bf
                pl.BlockSpec((1, h_pad), const2),                      # gamma
                pl.BlockSpec((1, h_pad), const2),                      # beta
                pl.BlockSpec((h_pad, l_pad), const2),                  # wc
                pl.BlockSpec((1, l_pad), const2),                      # bc
            ],
            out_specs=pl.BlockSpec((tile_b, l_pad), lambda i: (i, 0)),
            compiler_params=pltpu.CompilerParams(
                dimension_semantics=("parallel",)),
        )(text_bf, kg_pooled,
          prep["wt"], prep["bt"],
          prep["wft"], prep["wfk"], prep["bf"],
          prep["gamma"], prep["beta"],
          prep["wc"], prep["bc"])

        return out_pad[:B, :num_labels].astype(jnp.float32)

    return jax.jit(forward)


# --------------------------------------------------------------------------- #
# Pure-JAX f32 reference (mirrors the PyTorch forward, inference mode)
# --------------------------------------------------------------------------- #
def classify_reference(text_features, kg_vectors, params):
    text_f = jax.nn.relu(text_features @ params["wt"] + params["bt"])
    kg_f = jax.nn.relu(kg_vectors @ params["wk"] + params["bk"])
    att = jax.nn.sigmoid(jnp.sum(kg_f * params["wa"], axis=-1, keepdims=True)
                         + params["ba"])
    kg_f = kg_f * att
    kg_pooled = jnp.mean(kg_f, axis=0, keepdims=True)
    kg_pooled = jnp.broadcast_to(kg_pooled, (text_f.shape[0], kg_pooled.shape[1]))
    combined = jnp.concatenate([text_f, kg_pooled], axis=-1)
    fused = jax.nn.relu(combined @ params["wf"] + params["bf"])
    mean = jnp.mean(fused, axis=-1, keepdims=True)
    var = jnp.mean((fused - mean) ** 2, axis=-1, keepdims=True)
    normed = (fused - mean) * jax.lax.rsqrt(var + 1e-5) * params["gamma"] + params["beta"]
    return normed @ params["wc"] + params["bc"]


def init_params(key, hidden_dim=32, num_labels=4):
    ks = jax.random.split(key, 5)

    def linear(k, fan_in, fan_out):
        # PyTorch nn.Linear default init: U(-1/sqrt(fan_in), 1/sqrt(fan_in))
        bound = 1.0 / (fan_in ** 0.5)
        kw, kb = jax.random.split(k)
        w = jax.random.uniform(kw, (fan_in, fan_out), jnp.float32, -bound, bound)
        b = jax.random.uniform(kb, (1, fan_out), jnp.float32, -bound, bound)
        return w, b

    wt, bt = linear(ks[0], TEXT_IN, hidden_dim)          # text_linear
    wk, bk = linear(ks[1], KG_IN, hidden_dim)            # kg_linear
    wa_col, ba = linear(ks[2], hidden_dim, 1)            # kg_attention ([H,1],[1,1])
    wa = wa_col.T                                        # [1, H] for lane broadcast
    wf, bf = linear(ks[3], 2 * hidden_dim, hidden_dim)   # fusion_linear
    wc, bc = linear(ks[4], hidden_dim, num_labels)       # classifier
    gamma = jnp.ones((1, hidden_dim), jnp.float32)       # LayerNorm weight
    beta = jnp.zeros((1, hidden_dim), jnp.float32)       # LayerNorm bias
    return dict(wt=wt, bt=bt, wk=wk, bk=bk, wa=wa, ba=ba, wf=wf, bf=bf,
                gamma=gamma, beta=beta, wc=wc, bc=bc)


if __name__ == "__main__":
    B, N_KG, HIDDEN, NUM_LABELS = 2, 8, 32, 4

    key = jax.random.PRNGKey(0)
    k_text, k_kg, k_params = jax.random.split(key, 3)

    text_features = jax.random.normal(k_text, (B, TEXT_IN), jnp.float32)  # BERT CLS stand-in
    kg_vectors = jax.random.normal(k_kg, (N_KG, KG_IN), jnp.float32)      # entity_vectors
    params = init_params(k_params, hidden_dim=HIDDEN, num_labels=NUM_LABELS)

    forward = make_classify_fn(params, NUM_LABELS)
    logits = forward(text_features, kg_vectors)
    jax.block_until_ready(logits)

    assert logits.shape == (B, NUM_LABELS) and logits.dtype == jnp.float32
    assert bool(jnp.all(jnp.isfinite(logits)))

    # Loose tolerance vs f32 reference (bf16 MXU operands + bf16 logits slab by design).
    ref = classify_reference(text_features, kg_vectors, params)
    np.testing.assert_allclose(np.asarray(logits), np.asarray(ref),
                               rtol=1e-1, atol=1e-1)

    print("KERNEL_OK")
</pallas_src>

<mosaic_0001>
module attributes {stable_mosaic.version = 11 : i64} {
  func.func @kg_pool_kernel(%arg0: i32, %arg1: memref<16x384xbf16, #tpu.memory_space<vmem>>, %arg2: memref<384x128xbf16, #tpu.memory_space<vmem>>, %arg3: memref<1x128xf32, #tpu.memory_space<vmem>>, %arg4: memref<1x128xf32, #tpu.memory_space<vmem>>, %arg5: memref<1x1xf32, #tpu.memory_space<vmem>>, %arg6: memref<1x128xf32, #tpu.memory_space<vmem>>, %arg7: memref<1x128xf32, #tpu.memory_space<vmem>>) attributes {dimension_semantics = [#tpu.dimension_semantics<arbitrary>], iteration_bounds = array<i64: 1>, scalar_prefetch = 0 : i64, scratch_operands = 1 : i64, tpu.core_type = #tpu.core_type<tc>, window_params = [{transform_indices = @transform_0, window_bounds = array<i64: 16, 384>}, {pipeline_mode = #tpu.pipeline_mode<synchronous>, transform_indices = @transform_1, window_bounds = array<i64: 384, 128>}, {pipeline_mode = #tpu.pipeline_mode<synchronous>, transform_indices = @transform_2, window_bounds = array<i64: 1, 128>}, {pipeline_mode = #tpu.pipeline_mode<synchronous>, transform_indices = @transform_3, window_bounds = array<i64: 1, 128>}, {pipeline_mode = #tpu.pipeline_mode<synchronous>, transform_indices = @transform_4, window_bounds = array<i64: 1, 1>}, {pipeline_mode = #tpu.pipeline_mode<synchronous>, transform_indices = @transform_5, window_bounds = array<i64: 1, 128>}]} {
    %c0_i32 = arith.constant 0 : i32
    %0 = arith.cmpi eq, %arg0, %c0_i32 : i32
    %1 = arith.extui %0 : i1 to i32
    %c0_i32_0 = arith.constant 0 : i32
    %2 = arith.cmpi ne, %1, %c0_i32_0 : i32
    scf.if %2 {
      %cst_20 = arith.constant 0.000000e+00 : f32
      %43 = vector.broadcast %cst_20 : f32 to vector<1x128xf32>
      %c0_21 = arith.constant 0 : index
      %c0_22 = arith.constant 0 : index
      %44 = vector.load %arg7[%c0_21, %c0_22] : memref<1x128xf32, #tpu.memory_space<vmem>>, vector<1x128xf32>
      tpu.vector_store %arg7[%c0_21, %c0_22], %43 {strides = array<i32>} : memref<1x128xf32, #tpu.memory_space<vmem>>, vector<1x128xf32>,
    } else {
    }
    %c0 = arith.constant 0 : index
    %c0_1 = arith.constant 0 : index
    %3 = vector.load %arg1[%c0, %c0_1] : memref<16x384xbf16, #tpu.memory_space<vmem>>, vector<16x384xbf16>
    %c0_2 = arith.constant 0 : index
    %c0_3 = arith.constant 0 : index
    %4 = vector.load %arg2[%c0_2, %c0_3] : memref<384x128xbf16, #tpu.memory_space<vmem>>, vector<384x128xbf16>
    %cst = arith.constant dense<0.000000e+00> : vector<16x128xf32>
    %5 = tpu.matmul %3, %4, %cst {dimension_numbers = #tpu.dot_dimension_numbers<[1], [0], [0], [1], [0, 0, 1, 1], [], []>} : vector<16x384xbf16>, vector<384x128xbf16>, vector<16x128xf32> -> vector<16x128xf32>
    %c0_4 = arith.constant 0 : index
    %c0_5 = arith.constant 0 : index
    %6 = vector.load %arg3[%c0_4, %c0_5] : memref<1x128xf32, #tpu.memory_space<vmem>>, vector<1x128xf32>
    %7 = vector.broadcast %6 : vector<1x128xf32> to vector<16x128xf32>
    %8 = arith.addf %5, %7 : vector<16x128xf32>
    %cst_6 = arith.constant 0.000000e+00 : f32
    %9 = vector.broadcast %cst_6 : f32 to vector<16x128xf32>
    %10 = arith.maximumf %8, %9 : vector<16x128xf32>
    %c0_7 = arith.constant 0 : index
    %c0_8 = arith.constant 0 : index
    %11 = vector.load %arg4[%c0_7, %c0_8] : memref<1x128xf32, #tpu.memory_space<vmem>>, vector<1x128xf32>
    %12 = vector.broadcast %11 : vector<1x128xf32> to vector<16x128xf32>
    %13 = arith.mulf %10, %12 : vector<16x128xf32>
    %cst_9 = arith.constant dense<0.000000e+00> : vector<16xf32>
    %14 = vector.multi_reduction <add>, %13, %cst_9 [1] : vector<16x128xf32> to vector<16xf32>
    %15 = vector.shape_cast %14 : vector<16xf32> to vector<16x1xf32>
    %c0_10 = arith.constant 0 : index
    %c0_11 = arith.constant 0 : index
    %16 = vector.load %arg5[%c0_10, %c0_11] : memref<1x1xf32, #tpu.memory_space<vmem>>, vector<1x1xf32>
    %17 = vector.broadcast %16 : vector<1x1xf32> to vector<16x1xf32>
    %18 = arith.addf %15, %17 : vector<16x1xf32>
    %19 = arith.negf %18 : vector<16x1xf32>
    %20 = math.exp %19 : vector<16x1xf32>
    %cst_12 = arith.constant 1.000000e+00 : f32
    %21 = vector.broadcast %cst_12 : f32 to vector<16x1xf32>
    %22 = arith.addf %21, %20 : vector<16x1xf32>
    %23 = arith.divf %21, %22 : vector<16x1xf32>
    %c16_i32 = arith.constant 16 : i32
    %24 = arith.muli %arg0, %c16_i32 : i32
    %25 = tpu.iota {dimensions = array<i32: 0>} : vector<16x1xi32>
    %26 = vector.broadcast %24 : i32 to vector<16x1xi32>
    %27 = arith.addi %26, %25 : vector<16x1xi32>
    %c8_i32 = arith.constant 8 : i32
    %28 = vector.broadcast %c8_i32 : i32 to vector<16x1xi32>
    %29 = arith.cmpi slt, %27, %28 : vector<16x1xi32>
    %30 = arith.extui %29 : vector<16x1xi1> to vector<16x1xi32>
    %31 = arith.sitofp %30 : vector<16x1xi32> to vector<16x1xf32>
    %c0_13 = arith.constant 0 : index
    %c0_14 = arith.constant 0 : index
    %32 = vector.load %arg7[%c0_13, %c0_14] : memref<1x128xf32, #tpu.memory_space<vmem>>, vector<1x128xf32>
    %33 = arith.mulf %23, %31 : vector<16x1xf32>
    %34 = vector.broadcast %33 : vector<16x1xf32> to vector<16x128xf32>
    %35 = arith.mulf %10, %34 : vector<16x128xf32>
    %cst_15 = arith.constant dense<0.000000e+00> : vector<128xf32>
    %36 = vector.multi_reduction <add>, %35, %cst_15 [0] : vector<16x128xf32> to vector<128xf32>
    %37 = vector.shape_cast %36 : vector<128xf32> to vector<1x128xf32>
    %38 = arith.addf %32, %37 : vector<1x128xf32>
    %c0_16 = arith.constant 0 : index
    %c0_17 = arith.constant 0 : index
    %39 = vector.load %arg7[%c0_16, %c0_17] : memref<1x128xf32, #tpu.memory_space<vmem>>, vector<1x128xf32>
    tpu.vector_store %arg7[%c0_16, %c0_17], %38 {strides = array<i32>} : memref<1x128xf32, #tpu.memory_space<vmem>>, vector<1x128xf32>,
    %c0_i32_18 = arith.constant 0 : i32
    %40 = arith.cmpi eq, %arg0, %c0_i32_18 : i32
    %41 = arith.extui %40 : i1 to i32
    %c0_i32_19 = arith.constant 0 : i32
    %42 = arith.cmpi ne, %41, %c0_i32_19 : i32
    scf.if %42 {
      %c0_20 = arith.constant 0 : index
      %c0_21 = arith.constant 0 : index
      %43 = vector.load %arg7[%c0_20, %c0_21] : memref<1x128xf32, #tpu.memory_space<vmem>>, vector<1x128xf32>
      %cst_22 = arith.constant 1.250000e-01 : f32
      %44 = vector.broadcast %cst_22 : f32 to vector<1x128xf32>
      %45 = arith.mulf %43, %44 : vector<1x128xf32>
      %c0_23 = arith.constant 0 : index
      %c0_24 = arith.constant 0 : index
      %46 = vector.load %arg6[%c0_23, %c0_24] : memref<1x128xf32, #tpu.memory_space<vmem>>, vector<1x128xf32>
      tpu.vector_store %arg6[%c0_23, %c0_24], %45 {strides = array<i32>} : memref<1x128xf32, #tpu.memory_space<vmem>>, vector<1x128xf32>,
    } else {
    }
    return
  }
  func.func @transform_0(%arg0: i32) -> (i32, i32) {
    %c0_i32 = arith.constant 0 : i32
    %c0_i32_0 = arith.constant 0 : i32
    return %arg0, %c0_i32 : i32, i32
  }
  func.func @transform_1(%arg0: i32) -> (i32, i32) {
    %c0_i32 = arith.constant 0 : i32
    %c0_i32_0 = arith.constant 0 : i32
    %c0_i32_1 = arith.constant 0 : i32
    return %c0_i32, %c0_i32_0 : i32, i32
  }
  func.func @transform_2(%arg0: i32) -> (i32, i32) {
    %c0_i32 = arith.constant 0 : i32
    %c0_i32_0 = arith.constant 0 : i32
    %c0_i32_1 = arith.constant 0 : i32
    return %c0_i32, %c0_i32_0 : i32, i32
  }
  func.func @transform_3(%arg0: i32) -> (i32, i32) {
    %c0_i32 = arith.constant 0 : i32
    %c0_i32_0 = arith.constant 0 : i32
    %c0_i32_1 = arith.constant 0 : i32
    return %c0_i32, %c0_i32_0 : i32, i32
  }
  func.func @transform_4(%arg0: i32) -> (i32, i32) {
    %c0_i32 = arith.constant 0 : i32
    %c0_i32_0 = arith.constant 0 : i32
    %c0_i32_1 = arith.constant 0 : i32
    return %c0_i32, %c0_i32_0 : i32, i32
  }
  func.func @transform_5(%arg0: i32) -> (i32, i32) {
    %c0_i32 = arith.constant 0 : i32
    %c0_i32_0 = arith.constant 0 : i32
    %c0_i32_1 = arith.constant 0 : i32
    return %c0_i32, %c0_i32_0 : i32, i32
  }
}

module attributes {stable_mosaic.version = 11 : i64} {
  func.func @classify_kernel(%arg0: i32, %arg1: memref<16x768xbf16, #tpu.memory_space<vmem>>, %arg2: memref<1x128xf32, #tpu.memory_space<vmem>>, %arg3: memref<768x128xbf16, #tpu.memory_space<vmem>>, %arg4: memref<1x128xf32, #tpu.memory_space<vmem>>, %arg5: memref<128x128xbf16, #tpu.memory_space<vmem>>, %arg6: memref<128x128xbf16, #tpu.memory_space<vmem>>, %arg7: memref<1x128xf32, #tpu.memory_space<vmem>>, %arg8: memref<1x128xf32, #tpu.memory_space<vmem>>, %arg9: memref<1x128xf32, #tpu.memory_space<vmem>>, %arg10: memref<128x128xbf16, #tpu.memory_space<vmem>>, %arg11: memref<1x128xf32, #tpu.memory_space<vmem>>, %arg12: memref<16x128xbf16, #tpu.memory_space<vmem>>) attributes {dimension_semantics = [#tpu.dimension_semantics<parallel>], iteration_bounds = array<i64: 1>, scalar_prefetch = 0 : i64, scratch_operands = 0 : i64, tpu.core_type = #tpu.core_type<tc>, window_params = [{transform_indices = @transform_0, window_bounds = array<i64: 16, 768>}, {pipeline_mode = #tpu.pipeline_mode<synchronous>, transform_indices = @transform_1, window_bounds = array<i64: 1, 128>}, {pipeline_mode = #tpu.pipeline_mode<synchronous>, transform_indices = @transform_2, window_bounds = array<i64: 768, 128>}, {pipeline_mode = #tpu.pipeline_mode<synchronous>, transform_indices = @transform_3, window_bounds = array<i64: 1, 128>}, {pipeline_mode = #tpu.pipeline_mode<synchronous>, transform_indices = @transform_4, window_bounds = array<i64: 128, 128>}, {pipeline_mode = #tpu.pipeline_mode<synchronous>, transform_indices = @transform_5, window_bounds = array<i64: 128, 128>}, {pipeline_mode = #tpu.pipeline_mode<synchronous>, transform_indices = @transform_6, window_bounds = array<i64: 1, 128>}, {pipeline_mode = #tpu.pipeline_mode<synchronous>, transform_indices = @transform_7, window_bounds = array<i64: 1, 128>}, {pipeline_mode = #tpu.pipeline_mode<synchronous>, transform_indices = @transform_8, window_bounds = array<i64: 1, 128>}, {pipeline_mode = #tpu.pipeline_mode<synchronous>, transform_indices = @transform_9, window_bounds = array<i64: 128, 128>}, {pipeline_mode = #tpu.pipeline_mode<synchronous>, transform_indices = @transform_10, window_bounds = array<i64: 1, 128>}, {transform_indices = @transform_11, window_bounds = array<i64: 16, 128>}]} {
    %c0 = arith.constant 0 : index
    %c0_0 = arith.constant 0 : index
    %0 = vector.load %arg1[%c0, %c0_0] : memref<16x768xbf16, #tpu.memory_space<vmem>>, vector<16x768xbf16>
    %c0_1 = arith.constant 0 : index
    %c0_2 = arith.constant 0 : index
    %1 = vector.load %arg3[%c0_1, %c0_2] : memref<768x128xbf16, #tpu.memory_space<vmem>>, vector<768x128xbf16>
    %cst = arith.constant dense<0.000000e+00> : vector<16x128xf32>
    %2 = tpu.matmul %0, %1, %cst {dimension_numbers = #tpu.dot_dimension_numbers<[1], [0], [0], [1], [0, 0, 1, 1], [], []>} : vector<16x768xbf16>, vector<768x128xbf16>, vector<16x128xf32> -> vector<16x128xf32>
    %c0_3 = arith.constant 0 : index
    %c0_4 = arith.constant 0 : index
    %3 = vector.load %arg4[%c0_3, %c0_4] : memref<1x128xf32, #tpu.memory_space<vmem>>, vector<1x128xf32>
    %4 = vector.broadcast %3 : vector<1x128xf32> to vector<16x128xf32>
    %5 = arith.addf %2, %4 : vector<16x128xf32>
    %cst_5 = arith.constant 0.000000e+00 : f32
    %6 = vector.broadcast %cst_5 : f32 to vector<16x128xf32>
    %7 = arith.maximumf %5, %6 : vector<16x128xf32>
    %8 = arith.truncf %7 : vector<16x128xf32> to vector<16x128xbf16>
    %c0_6 = arith.constant 0 : index
    %c0_7 = arith.constant 0 : index
    %9 = vector.load %arg5[%c0_6, %c0_7] : memref<128x128xbf16, #tpu.memory_space<vmem>>, vector<128x128xbf16>
    %cst_8 = arith.constant dense<0.000000e+00> : vector<16x128xf32>
    %10 = tpu.matmul %8, %9, %cst_8 {dimension_numbers = #tpu.dot_dimension_numbers<[1], [0], [0], [1], [0, 0, 1, 1], [], []>} : vector<16x128xbf16>, vector<128x128xbf16>, vector<16x128xf32> -> vector<16x128xf32>
    %c0_9 = arith.constant 0 : index
    %c0_10 = arith.constant 0 : index
    %11 = vector.load %arg2[%c0_9, %c0_10] : memref<1x128xf32, #tpu.memory_space<vmem>>, vector<1x128xf32>
    %12 = arith.truncf %11 : vector<1x128xf32> to vector<1x128xbf16>
    %c0_11 = arith.constant 0 : index
    %c0_12 = arith.constant 0 : index
    %13 = vector.load %arg6[%c0_11, %c0_12] : memref<128x128xbf16, #tpu.memory_space<vmem>>, vector<128x128xbf16>
    %cst_13 = arith.constant dense<0.000000e+00> : vector<1x128xf32>
    %14 = tpu.matmul %12, %13, %cst_13 {dimension_numbers = #tpu.dot_dimension_numbers<[1], [0], [0], [1], [0, 0, 1, 1], [], []>} : vector<1x128xbf16>, vector<128x128xbf16>, vector<1x128xf32> -> vector<1x128xf32>
    %15 = vector.broadcast %14 : vector<1x128xf32> to vector<16x128xf32>
    %16 = arith.addf %10, %15 : vector<16x128xf32>
    %c0_14 = arith.constant 0 : index
    %c0_15 = arith.constant 0 : index
    %17 = vector.load %arg7[%c0_14, %c0_15] : memref<1x128xf32, #tpu.memory_space<vmem>>, vector<1x128xf32>
    %18 = vector.broadcast %17 : vector<1x128xf32> to vector<16x128xf32>
    %19 = arith.addf %16, %18 : vector<16x128xf32>
    %cst_16 = arith.constant 0.000000e+00 : f32
    %20 = vector.broadcast %cst_16 : f32 to vector<16x128xf32>
    %21 = arith.maximumf %19, %20 : vector<16x128xf32>
    %cst_17 = arith.constant dense<0.000000e+00> : vector<16xf32>
    %22 = vector.multi_reduction <add>, %21, %cst_17 [1] : vector<16x128xf32> to vector<16xf32>
    %23 = vector.shape_cast %22 : vector<16xf32> to vector<16x1xf32>
    %cst_18 = arith.constant 3.125000e-02 : f32
    %24 = vector.broadcast %cst_18 : f32 to vector<16x1xf32>
    %25 = arith.mulf %23, %24 : vector<16x1xf32>
    %26 = tpu.iota {dimensions = array<i32: 1>} : vector<1x128xi32>
    %c32_i32 = arith.constant 32 : i32
    %27 = vector.broadcast %c32_i32 : i32 to vector<1x128xi32>
    %28 = arith.cmpi slt, %26, %27 : vector<1x128xi32>
    %29 = arith.extui %28 : vector<1x128xi1> to vector<1x128xi32>
    %30 = arith.sitofp %29 : vector<1x128xi32> to vector<1x128xf32>
    %31 = vector.broadcast %25 : vector<16x1xf32> to vector<16x128xf32>
    %32 = arith.subf %21, %31 : vector<16x128xf32>
    %33 = vector.broadcast %30 : vector<1x128xf32> to vector<16x128xf32>
    %34 = arith.mulf %32, %33 : vector<16x128xf32>
    %35 = arith.mulf %34, %34 : vector<16x128xf32>
    %cst_19 = arith.constant dense<0.000000e+00> : vector<16xf32>
    %36 = vector.multi_reduction <add>, %35, %cst_19 [1] : vector<16x128xf32> to vector<16xf32>
    %37 = vector.shape_cast %36 : vector<16xf32> to vector<16x1xf32>
    %cst_20 = arith.constant 3.125000e-02 : f32
    %38 = vector.broadcast %cst_20 : f32 to vector<16x1xf32>
    %39 = arith.mulf %37, %38 : vector<16x1xf32>
    %cst_21 = arith.constant 9.99999974E-6 : f32
    %40 = vector.broadcast %cst_21 : f32 to vector<16x1xf32>
    %41 = arith.addf %39, %40 : vector<16x1xf32>
    %42 = math.rsqrt %41 : vector<16x1xf32>
    %c0_22 = arith.constant 0 : index
    %c0_23 = arith.constant 0 : index
    %43 = vector.load %arg8[%c0_22, %c0_23] : memref<1x128xf32, #tpu.memory_space<vmem>>, vector<1x128xf32>
    %44 = vector.broadcast %42 : vector<16x1xf32> to vector<16x128xf32>
    %45 = vector.broadcast %43 : vector<1x128xf32> to vector<16x128xf32>
    %46 = arith.mulf %44, %45 : vector<16x128xf32>
    %47 = arith.mulf %34, %46 : vector<16x128xf32>
    %c0_24 = arith.constant 0 : index
    %c0_25 = arith.constant 0 : index
    %48 = vector.load %arg9[%c0_24, %c0_25] : memref<1x128xf32, #tpu.memory_space<vmem>>, vector<1x128xf32>
    %49 = vector.broadcast %48 : vector<1x128xf32> to vector<16x128xf32>
    %50 = arith.addf %47, %49 : vector<16x128xf32>
    %51 = arith.truncf %50 : vector<16x128xf32> to vector<16x128xbf16>
    %c0_26 = arith.constant 0 : index
    %c0_27 = arith.constant 0 : index
    %52 = vector.load %arg10[%c0_26, %c0_27] : memref<128x128xbf16, #tpu.memory_space<vmem>>, vector<128x128xbf16>
    %cst_28 = arith.constant dense<0.000000e+00> : vector<16x128xf32>
    %53 = tpu.matmul %51, %52, %cst_28 {dimension_numbers = #tpu.dot_dimension_numbers<[1], [0], [0], [1], [0, 0, 1, 1], [], []>} : vector<16x128xbf16>, vector<128x128xbf16>, vector<16x128xf32> -> vector<16x128xf32>
    %c0_29 = arith.constant 0 : index
    %c0_30 = arith.constant 0 : index
    %54 = vector.load %arg11[%c0_29, %c0_30] : memref<1x128xf32, #tpu.memory_space<vmem>>, vector<1x128xf32>
    %55 = vector.broadcast %54 : vector<1x128xf32> to vector<16x128xf32>
    %56 = arith.addf %53, %55 : vector<16x128xf32>
    %57 = arith.truncf %56 : vector<16x128xf32> to vector<16x128xbf16>
    %c0_31 = arith.constant 0 : index
    %c0_32 = arith.constant 0 : index
    %58 = vector.load %arg12[%c0_31, %c0_32] : memref<16x128xbf16, #tpu.memory_space<vmem>>, vector<16x128xbf16>
    tpu.vector_store %arg12[%c0_31, %c0_32], %57 {strides = array<i32>} : memref<16x128xbf16, #tpu.memory_space<vmem>>, vector<16x128xbf16>,
    return
  }
  func.func @transform_0(%arg0: i32) -> (i32, i32) {
    %c0_i32 = arith.constant 0 : i32
    %c0_i32_0 = arith.constant 0 : i32
    return %arg0, %c0_i32 : i32, i32
  }
  func.func @transform_1(%arg0: i32) -> (i32, i32) {
    %c0_i32 = arith.constant 0 : i32
    %c0_i32_0 = arith.constant 0 : i32
    %c0_i32_1 = arith.constant 0 : i32
    return %c0_i32, %c0_i32_0 : i32, i32
  }
  func.func @transform_2(%arg0: i32) -> (i32, i32) {
    %c0_i32 = arith.constant 0 : i32
    %c0_i32_0 = arith.constant 0 : i32
    %c0_i32_1 = arith.constant 0 : i32
    return %c0_i32, %c0_i32_0 : i32, i32
  }
  func.func @transform_3(%arg0: i32) -> (i32, i32) {
    %c0_i32 = arith.constant 0 : i32
    %c0_i32_0 = arith.constant 0 : i32
    %c0_i32_1 = arith.constant 0 : i32
    return %c0_i32, %c0_i32_0 : i32, i32
  }
  func.func @transform_4(%arg0: i32) -> (i32, i32) {
    %c0_i32 = arith.constant 0 : i32
    %c0_i32_0 = arith.constant 0 : i32
    %c0_i32_1 = arith.constant 0 : i32
    return %c0_i32, %c0_i32_0 : i32, i32
  }
  func.func @transform_5(%arg0: i32) -> (i32, i32) {
    %c0_i32 = arith.constant 0 : i32
    %c0_i32_0 = arith.constant 0 : i32
    %c0_i32_1 = arith.constant 0 : i32
    return %c0_i32, %c0_i32_0 : i32, i32
  }
  func.func @transform_6(%arg0: i32) -> (i32, i32) {
    %c0_i32 = arith.constant 0 : i32
    %c0_i32_0 = arith.constant 0 : i32
    %c0_i32_1 = arith.constant 0 : i32
    return %c0_i32, %c0_i32_0 : i32, i32
  }
  func.func @transform_7(%arg0: i32) -> (i32, i32) {
    %c0_i32 = arith.constant 0 : i32
    %c0_i32_0 = arith.constant 0 : i32
    %c0_i32_1 = arith.constant 0 : i32
    return %c0_i32, %c0_i32_0 : i32, i32
  }
  func.func @transform_8(%arg0: i32) -> (i32, i32) {
    %c0_i32 = arith.constant 0 : i32
    %c0_i32_0 = arith.constant 0 : i32
    %c0_i32_1 = arith.constant 0 : i32
    return %c0_i32, %c0_i32_0 : i32, i32
  }
  func.func @transform_9(%arg0: i32) -> (i32, i32) {
    %c0_i32 = arith.constant 0 : i32
    %c0_i32_0 = arith.constant 0 : i32
    %c0_i32_1 = arith.constant 0 : i32
    return %c0_i32, %c0_i32_0 : i32, i32
  }
  func.func @transform_10(%arg0: i32) -> (i32, i32) {
    %c0_i32 = arith.constant 0 : i32
    %c0_i32_0 = arith.constant 0 : i32
    %c0_i32_1 = arith.constant 0 : i32
    return %c0_i32, %c0_i32_0 : i32, i32
  }
  func.func @transform_11(%arg0: i32) -> (i32, i32) {
    %c0_i32 = arith.constant 0 : i32
    %c0_i32_0 = arith.constant 0 : i32
    return %arg0, %c0_i32 : i32, i32
  }
}

</mosaic_0001>

<llo_original>
// kernel: forward.2
$region0: #{forward.2}
  #allocation0 [shape = 'u32[]', space=smem, size = 0x4, offset = 0x4, fixed_abs, tag = 'smem constant byte address 0x4 - core index']
  #allocation1 [shape = 'u32[72,128]{1,0:T(1,128)}', space=vmem, size = 0x9000, scoped, tag = 'internal scratch']
  #allocation2 [shape = 'f32[1,128]{1,0:T(1,128)}', space=vmem, size = 0x200, scoped, tag = 'scratch operand']
  #allocation3 [shape = 'f32[1,1]{1,0:T(1,128)S(1)}', space=vmem, size = 0x200, scoped, tag = 'scoped memory for forward.2']
  %s0 = inlined_call_operand.vmem [shape: bf16[16,384], index: 0, kind: input, shape index: {}]
  %s1 = inlined_call_operand.hbm [shape: bf16[384,128], index: 1, kind: input, shape index: {}]
  %s2 = inlined_call_operand.vmem [shape: f32[1,128], index: 2, kind: input, shape index: {}]
  %s3 = inlined_call_operand.vmem [shape: f32[1,128], index: 3, kind: input, shape index: {}]
  %s4 = inlined_call_operand.<no memory space> [shape: f32[1,1], index: 4, kind: input, shape index: {}]
  %s5 = inlined_call_operand.vmem [shape: f32[1,128], index: 5, kind: output, shape index: {}]
  %s6 = sld [smem:[#allocation0]]
  $region42: #{forward.2} parent=0
    _
  %s8 = ssub.s32 1, %s6
  %s9 = scalar_select 0, %s8, %s6
  %v10 = vstv %s4
  %11 = vst [vmem:[#allocation3] sm:$0x1] %v10
  $region1: #{forward.2} parent=0
    #allocation4 [shape = 'u8[98304]{0}', space=vmem, size = 0x18000, scoped, tag = 'input window, operand 1, single buffered']
    #allocation5 [shape = 's32[1]{0}', space=sflag, size = 0x4, scoped, tag = 'scoped memory for forward.2']
    %12 = vsyncpa [#allocation5], 0
    // Predicated region
    $region2: #{forward.2} parent=1 // pred_check
      _
    $region3: #{forward.2} parent=1 // pred_check_branch
      %14 = sbr.rel (0) target = $region5
    $region4: #{forward.2} parent=1 // pred_region
      _
    $region5: #{forward.2} parent=1 // pred_fallthru
      _
    // Predicated region
    $region6: #{forward.2} parent=1 // pred_check
      _
    $region7: #{forward.2} parent=1 // pred_check_branch
      %16 = sbr.rel (0) target = $region9
    $region8: #{forward.2} parent=1 // pred_region
      %18 = vsyncadd [#allocation5], 0
      %s19 = sshll.u32 %s1, 4
      %s20 = int_to_ptr.hbm [resolvable:$true] %s19
      %s21 = sshll.u32 [#allocation4], 4
      %s22 = int_to_ptr.vmem [resolvable:$true] %s21
      %27 = dma.hbm_to_vmem [thread:$0]  %s20, 3072, %s22, [#allocation5], 64, 64, 4
    $region9: #{forward.2} parent=1 // pred_fallthru
      _
    // Predicated region
    $region10: #{forward.2} parent=1 // pred_check
      _
    $region11: #{forward.2} parent=1 // pred_check_branch
      %29 = sbr.rel (0) target = $region13
    $region12: #{forward.2} parent=1 // pred_region
      _
    $region13: #{forward.2} parent=1 // pred_fallthru
      _
    // Predicated region
    $region14: #{forward.2} parent=1 // pred_check
      _
    $region15: #{forward.2} parent=1 // pred_check_branch
      %31 = sbr.rel (0) target = $region17
    $region16: #{forward.2} parent=1 // pred_region
      _
    $region17: #{forward.2} parent=1 // pred_fallthru
      _
    // Predicated region
    $region18: #{forward.2} parent=1 // pred_check
      _
    $region19: #{forward.2} parent=1 // pred_check_branch
      %33 = sbr.rel (0) target = $region21
    $region20: #{forward.2} parent=1 // pred_region
      _
    $region21: #{forward.2} parent=1 // pred_fallthru
      _
    // Predicated region
    $region22: #{forward.2} parent=1 // pred_check
      _
    $region23: #{forward.2} parent=1 // pred_check_branch
      %35 = sbr.rel (0) target = $region25
    $region24: #{forward.2} parent=1 // pred_region
      %37 = dma.done [#allocation5], 3072
    $region25: #{forward.2} parent=1 // pred_fallthru
      _
    %p38 = scmp.eq.s32.totalorder 0, 0
    // Predicated region
    $region26: #{forward.2} parent=1 // pred_check
      %p39 = pneg %p38
    $region27: #{forward.2} parent=1 // pred_check_branch
      %41 = sbr.rel (%p39) target = $region29
    $region28: #{forward.2} parent=1 // pred_region
      %42 = vst [vmem:[#allocation2] sm:$0x1] 0.0
    $region29: #{forward.2} parent=1 // pred_fallthru
      _
    %v43 = vld [vmem:[%s0] sm:$0xff]
    %v44 = vld [vmem:[%s0 + $0x8] sm:$0xf]
    %v45 = vld [vmem:[%s0 + $0xc] sm:$0xff]
    %v46 = vld [vmem:[%s0 + $0x14] sm:$0xf]
    %v47 = vld [vmem:[#allocation4] sm:$0xf]
    %v48 = vld [vmem:[#allocation4 + $0x4] sm:$0xf]
    %v49 = vld [vmem:[#allocation4 + $0x8] sm:$0xf]
    %v50 = vld [vmem:[#allocation4 + $0xc] sm:$0xf]
    %v51 = vld [vmem:[#allocation4 + $0x10] sm:$0xf]
    %v52 = vld [vmem:[#allocation4 + $0x14] sm:$0xf]
    %v53 = vld [vmem:[#allocation4 + $0x18] sm:$0xf]
    %v54 = vld [vmem:[#allocation4 + $0x1c] sm:$0xf]
    %v55 = vld [vmem:[#allocation4 + $0x20] sm:$0xf]
    %v56 = vld [vmem:[#allocation4 + $0x24] sm:$0xf]
    %v57 = vld [vmem:[#allocation4 + $0x28] sm:$0xf]
    %v58 = vld [vmem:[#allocation4 + $0x2c] sm:$0xf]
    %v59 = vld [vmem:[#allocation4 + $0x30] sm:$0xf]
    %v60 = vld [vmem:[#allocation4 + $0x34] sm:$0xf]
    %v61 = vld [vmem:[#allocation4 + $0x38] sm:$0xf]
    %v62 = vld [vmem:[#allocation4 + $0x3c] sm:$0xf]
    %v63 = vld [vmem:[#allocation4 + $0x40] sm:$0xf]
    %v64 = vld [vmem:[#allocation4 + $0x44] sm:$0xf]
    %v65 = vld [vmem:[#allocation4 + $0x48] sm:$0xf]
    %v66 = vld [vmem:[#allocation4 + $0x4c] sm:$0xf]
    %v67 = vld [vmem:[#allocation4 + $0x50] sm:$0xf]
    %v68 = vld [vmem:[#allocation4 + $0x54] sm:$0xf]
    %v69 = vld [vmem:[#allocation4 + $0x58] sm:$0xf]
    %v70 = vld [vmem:[#allocation4 + $0x5c] sm:$0xf]
    %v71 = vld [vmem:[#allocation4 + $0x60] sm:$0xf]
    %v72 = vld [vmem:[#allocation4 + $0x64] sm:$0xf]
    %v73 = vld [vmem:[#allocation4 + $0x68] sm:$0xf]
    %v74 = vld [vmem:[#allocation4 + $0x6c] sm:$0xf]
    %v75 = vld [vmem:[#allocation4 + $0x70] sm:$0xf]
    %v76 = vld [vmem:[#allocation4 + $0x74] sm:$0xf]
    %v77 = vld [vmem:[#allocation4 + $0x78] sm:$0xf]
    %v78 = vld [vmem:[#allocation4 + $0x7c] sm:$0xf]
    %v79 = vld [vmem:[#allocation4 + $0x80] sm:$0xf]
    %v80 = vld [vmem:[#allocation4 + $0x84] sm:$0xf]
    %v81 = vld [vmem:[#allocation4 + $0x88] sm:$0xf]
    %v82 = vld [vmem:[#allocation4 + $0x8c] sm:$0xf]
    %v83 = vld [vmem:[#allocation4 + $0x90] sm:$0xf]
    %v84 = vld [vmem:[#allocation4 + $0x94] sm:$0xf]
    %v85 = vld [vmem:[#allocation4 + $0x98] sm:$0xf]
    %v86 = vld [vmem:[#allocation4 + $0x9c] sm:$0xf]
    %v87 = vld [vmem:[#allocation4 + $0xa0] sm:$0xf]
    %v88 = vld [vmem:[#allocation4 + $0xa4] sm:$0xf]
    %v89 = vld [vmem:[#allocation4 + $0xa8] sm:$0xf]
    %v90 = vld [vmem:[#allocation4 + $0xac] sm:$0xf]
    %v91 = vld [vmem:[#allocation4 + $0xb0] sm:$0xf]
    %v92 = vld [vmem:[#allocation4 + $0xb4] sm:$0xf]
    %v93 = vld [vmem:[#allocation4 + $0xb8] sm:$0xf]
    %v94 = vld [vmem:[#allocation4 + $0xbc] sm:$0xf]
    %v95 = vld [vmem:[%s2] sm:$0x1]
    %v97 = vperm.slane %v95, 0
    %v103 = vunpack.c.l.b16 %v43
    %v104 = vunpack.c.h.b16 %v43
    %v105 = vunpack.c.l.b16 %v44
    %v106 = vunpack.c.l.b16 %v45
    %v107 = vunpack.c.h.b16 %v45
    %v108 = vunpack.c.l.b16 %v46
    %v109 = vpack.c.b16 %v106, %v103
    %v110 = vpack.c.b16 %v107, %v104
    %v111 = vpack.c.b16 %v108, %v105
    %v163 = vunpack.c.l.b16 %v47
    %v164 = vunpack.c.l.b16 %v48
    %v165 = vunpack.c.l.b16 %v49
    %v166 = vunpack.c.l.b16 %v50
    %v167 = vunpack.c.l.b16 %v51
    %v168 = vunpack.c.l.b16 %v52
    %v169 = vunpack.c.l.b16 %v53
    %v170 = vunpack.c.l.b16 %v54
    %v171 = vunpack.c.l.b16 %v55
    %v172 = vunpack.c.l.b16 %v56
    %v173 = vunpack.c.l.b16 %v57
    %v174 = vunpack.c.l.b16 %v58
    %v175 = vunpack.c.l.b16 %v59
    %v176 = vunpack.c.l.b16 %v60
    %v177 = vunpack.c.l.b16 %v61
    %v178 = vunpack.c.l.b16 %v62
    %v179 = vunpack.c.l.b16 %v63
    %v180 = vunpack.c.l.b16 %v64
    %v181 = vunpack.c.l.b16 %v65
    %v182 = vunpack.c.l.b16 %v66
    %v183 = vunpack.c.l.b16 %v67
    %v184 = vunpack.c.l.b16 %v68
    %v185 = vunpack.c.l.b16 %v69
    %v186 = vunpack.c.l.b16 %v70
    %v187 = vunpack.c.l.b16 %v71
    %v188 = vunpack.c.l.b16 %v72
    %v189 = vunpack.c.l.b16 %v73
    %v190 = vunpack.c.l.b16 %v74
    %v191 = vunpack.c.l.b16 %v75
    %v192 = vunpack.c.l.b16 %v76
    %v193 = vunpack.c.l.b16 %v77
    %v194 = vunpack.c.l.b16 %v78
    %v195 = vunpack.c.l.b16 %v79
    %v196 = vunpack.c.l.b16 %v80
    %v197 = vunpack.c.l.b16 %v81
    %v198 = vunpack.c.l.b16 %v82
    %v199 = vunpack.c.l.b16 %v83
    %v200 = vunpack.c.l.b16 %v84
    %v201 = vunpack.c.l.b16 %v85
    %v202 = vunpack.c.l.b16 %v86
    %v203 = vunpack.c.l.b16 %v87
    %v204 = vunpack.c.l.b16 %v88
    %v205 = vunpack.c.l.b16 %v89
    %v206 = vunpack.c.l.b16 %v90
    %v207 = vunpack.c.l.b16 %v91
    %v208 = vunpack.c.l.b16 %v92
    %v209 = vunpack.c.l.b16 %v93
    %v210 = vunpack.c.l.b16 %v94
    %v211 = vpack.c.b16 %v164, %v163
    %v212 = vpack.c.b16 %v166, %v165
    %v213 = vpack.c.b16 %v168, %v167
    %v214 = vpack.c.b16 %v170, %v169
    %v215 = vpack.c.b16 %v172, %v171
    %v216 = vpack.c.b16 %v174, %v173
    %v217 = vpack.c.b16 %v176, %v175
    %v218 = vpack.c.b16 %v178, %v177
    %v219 = vpack.c.b16 %v180, %v179
    %v220 = vpack.c.b16 %v182, %v181
    %v221 = vpack.c.b16 %v184, %v183
    %v222 = vpack.c.b16 %v186, %v185
    %v223 = vpack.c.b16 %v188, %v187
    %v224 = vpack.c.b16 %v190, %v189
    %v225 = vpack.c.b16 %v192, %v191
    %v226 = vpack.c.b16 %v194, %v193
    %v227 = vpack.c.b16 %v196, %v195
    %v228 = vpack.c.b16 %v198, %v197
    %v229 = vpack.c.b16 %v200, %v199
    %v230 = vpack.c.b16 %v202, %v201
    %v231 = vpack.c.b16 %v204, %v203
    %v232 = vpack.c.b16 %v206, %v205
    %v233 = vpack.c.b16 %v208, %v207
    %v234 = vpack.c.b16 %v210, %v209
    %259 = vmatpush.bf16.msra.mxu0 %v218
    %260 = vmatpush.bf16.msra.mxu0 %v217
    %261 = vmatpush.bf16.msra.mxu0 %v216
    %262 = vmatpush.bf16.msra.mxu0 %v215
    %263 = vmatpush.bf16.msra.mxu0 %v214
    %264 = vmatpush.bf16.msra.mxu0 %v213
    %265 = vmatpush.bf16.msra.mxu0 %v212
    %266 = vmatpush.bf16.msra.mxu0 %v211
    %267 = vmatmul.bf16.gmra.mxu0 %v109
    %v268 = vpop.f32.mrf.mxu0
    %v269 = vadd.f32 %v97, %v268
    %v270 = vpop.f32.mrf.mxu0
    %v271 = vadd.f32 %v97, %v270
    %272 = vdwg.mxu0
    %273 = vmatpush.bf16.msra.mxu0 %v226
    %274 = vmatpush.bf16.msra.mxu0 %v225
    %275 = vmatpush.bf16.msra.mxu0 %v224
    %276 = vmatpush.bf16.msra.mxu0 %v223
    %277 = vmatpush.bf16.msra.mxu0 %v222
    %278 = vmatpush.bf16.msra.mxu0 %v221
    %279 = vmatpush.bf16.msra.mxu0 %v220
    %280 = vmatpush.bf16.msra.mxu0 %v219
    %281 = vmatmul.bf16.gmra.mxu0 %v110
    %v282 = vpop.f32.mrf.mxu0
    %v283 = vadd.f32 %v269, %v282
    %v284 = vpop.f32.mrf.mxu0
    %v285 = vadd.f32 %v271, %v284
    %286 = vdwg.mxu0
    %287 = vmatpush.bf16.msra.mxu0 %v234
    %288 = vmatpush.bf16.msra.mxu0 %v233
    %289 = vmatpush.bf16.msra.mxu0 %v232
    %290 = vmatpush.bf16.msra.mxu0 %v231
    %291 = vmatpush.bf16.msra.mxu0 %v230
    %292 = vmatpush.bf16.msra.mxu0 %v229
    %293 = vmatpush.bf16.msra.mxu0 %v228
    %294 = vmatpush.bf16.msra.mxu0 %v227
    %295 = vmatmul.bf16.gmra.mxu0 %v111
    %v296 = vpop.f32.mrf.mxu0
    %v297 = vadd.f32 %v283, %v296
    %v298 = vpop.f32.mrf.mxu0
    %v299 = vadd.f32 %v285, %v298
    %300 = vdwg.mxu0
    %v301 = vmax.f32 %v297, 0.0
    %v302 = vmax.f32 %v299, 0.0
    %v303 = vld [vmem:[%s3] sm:$0x1]
    %v305 = vperm.slane %v303, 0
    %v307 = vmul.f32 %v301, %v305
    %v308 = vmul.f32 %v302, %v305
    %309 = vadd.xlane.f32.xlu0 %v307
    %v310 = vpop.xlane.xlu0 %309
    %311 = vadd.xlane.f32.xlu0 %v308
    %v312 = vpop.xlane.xlu0 %311
    %v313 = vld [vmem:[#allocation3] sm:$0x1]
    %v315 = vperm.slane %v313, 0
    %v317 = vadd.f32 %v310, %v315
    %v318 = vadd.f32 %v312, %v315
    %v319 = vxor.u32 %v317, 2147483648
    %v320 = vxor.u32 %v318, 2147483648
    %v321 = vmul.f32 %v319, 1.442695
    %v322 = vpow.pop %v321
    %v323 = vmul.f32 %v320, 1.442695
    %v324 = vpow.pop %v323
    %v325 = vadd.f32 %v322, 1.0
    %v326 = vadd.f32 %v324, 1.0
    %v327 = vrcp.pop %v325
    %v328 = vmul.f32 %v325, %v327
    %v329 = vsub.f32 1.0, %v328
    %v330 = vmul.f32 %v327, %v329
    %v331 = vadd.f32 %v327, %v330
    %vm332 = vweird.f32 %v325
    %vm333 = vweird.f32 %v327
    %vm334 = vmor %vm332, %vm333
    %v335 = vsel %vm334, %v327, %v331
    %v336 = vand.u32 2147483647, %v325
    %vm337 = vcmp.eq.f32.partialorder %v336, 8.507059e+37
    %v338 = vand.u32 %v325, 2147483648
    %v339 = vor.u32 1.1754944e-38, %v338
    %v340 = vsel %vm337, %v339, %v335
    %v341 = vmul.f32 1.0, %v340
    %v342 = vrcp.pop %v326
    %v343 = vmul.f32 %v326, %v342
    %v344 = vsub.f32 1.0, %v343
    %v345 = vmul.f32 %v342, %v344
    %v346 = vadd.f32 %v342, %v345
    %vm347 = vweird.f32 %v326
    %vm348 = vweird.f32 %v342
    %vm349 = vmor %vm347, %vm348
    %v350 = vsel %vm349, %v342, %v346
    %v351 = vand.u32 2147483647, %v326
    %vm352 = vcmp.eq.f32.partialorder %v351, 8.507059e+37
    %v353 = vand.u32 %v326, 2147483648
    %v354 = vor.u32 1.1754944e-38, %v353
    %v355 = vsel %vm352, %v354, %v350
    %v356 = vmul.f32 1.0, %v355
    %s357 = smul.u32 0, 16
    %v358 = vlaneseq
    %v359 = vshrl.u32 %v358, 7
    %v360 = vadd.s32 %v359, 8
    %v361 = vstv %s357
    %v362 = vadd.s32 %v361, %v359
    %v363 = vadd.s32 %v361, %v360
    %vm364 = vcmp.lt.s32.totalorder %v362, 8
    %vm365 = vcmp.lt.s32.totalorder %v363, 8
    %v366 = vsel %vm364, 1, 0
    %v367 = vsel %vm365, 1, 0
    %v368 = vcvt.s32.f32 %v366
    %v369 = vcvt.s32.f32 %v367
    %v370 = vld [vmem:[#allocation2] sm:$0x1]
    %v371 = vmul.f32 %v341, %v368
    %v372 = vmul.f32 %v356, %v369
    %374 = vset.pattern.permute.xlu0 0
    %375 = vperm.xlu0 %374, %v371
    %v376 = vpop.permute.xlu0 %375
    %379 = vset.pattern.permute.xlu0 0
    %380 = vperm.xlu0 %379, %v372
    %v381 = vpop.permute.xlu0 %380
    %v383 = vmul.f32 %v301, %v376
    %v384 = vmul.f32 %v302, %v381
    %v385 = vadd.f32 %v383, %v384
    %v386 = vrot.slane %v385, 4
    %v387 = vadd.f32 %v385, %v386
    %v388 = vrot.slane %v387, 2
    %v389 = vadd.f32 %v387, %v388
    %v390 = vrot.slane %v389, 1
    %v391 = vadd.f32 %v389, %v390
    %v392 = vadd.f32 %v370, %v391
    %393 = vst [vmem:[#allocation2] sm:$0x1] %v392
    // Predicated region
    $region30: #{forward.2} parent=1 // pred_check
      %p394 = pneg %p38
    $region31: #{forward.2} parent=1 // pred_check_branch
      %396 = sbr.rel (%p394) target = $region33
    $region32: #{forward.2} parent=1 // pred_region
      %v397 = vld [vmem:[#allocation2] sm:$0x1]
      %v398 = vmul.f32 %v397, 0.125
      %399 = vst [vmem:[%s5] sm:$0x1] %v398
    $region33: #{forward.2} parent=1 // pred_fallthru
      _
    // Predicated region
    $region34: #{forward.2} parent=1 // pred_check
      _
    $region35: #{forward.2} parent=1 // pred_check_branch
      %401 = sbr.rel (0) target = $region37
    $region36: #{forward.2} parent=1 // pred_region
      _
    $region37: #{forward.2} parent=1 // pred_fallthru
      _
    // Predicated region
    $region38: #{forward.2} parent=1 // pred_check
      _
    $region39: #{forward.2} parent=1 // pred_check_branch
      %403 = sbr.rel (0) target = $region41
    $region40: #{forward.2} parent=1 // pred_region
      _
    $region41: #{forward.2} parent=1 // pred_fallthru
      _
    %404 = vsyncpa [#allocation5], 1

// kernel: forward.3
$region0: #{forward.3}
  #allocation0 [shape = 'u32[]', space=smem, size = 0x4, offset = 0x4, fixed_abs, tag = 'smem constant byte address 0x4 - core index']
  #allocation1 [shape = 'u32[72,128]{1,0:T(1,128)}', space=vmem, size = 0x9000, scoped, tag = 'internal scratch']
  %s0 = inlined_call_operand.vmem [shape: bf16[16,768], index: 0, kind: input, shape index: {}]
  %s1 = inlined_call_operand.vmem [shape: f32[1,128], index: 1, kind: input, shape index: {}]
  %s2 = inlined_call_operand.hbm [shape: bf16[768,128], index: 2, kind: input, shape index: {}]
  %s3 = inlined_call_operand.vmem [shape: f32[1,128], index: 3, kind: input, shape index: {}]
  %s4 = inlined_call_operand.hbm [shape: bf16[128,128], index: 4, kind: input, shape index: {}]
  %s5 = inlined_call_operand.vmem [shape: bf16[128,128], index: 5, kind: input, shape index: {}]
  %s6 = inlined_call_operand.vmem [shape: f32[1,128], index: 6, kind: input, shape index: {}]
  %s7 = inlined_call_operand.vmem [shape: f32[1,128], index: 7, kind: input, shape index: {}]
  %s8 = inlined_call_operand.vmem [shape: f32[1,128], index: 8, kind: input, shape index: {}]
  %s9 = inlined_call_operand.vmem [shape: bf16[128,128], index: 9, kind: input, shape index: {}]
  %s10 = inlined_call_operand.vmem [shape: f32[1,128], index: 10, kind: input, shape index: {}]
  %s11 = inlined_call_operand.vmem [shape: bf16[16,128], index: 11, kind: output, shape index: {}]
  %s12 = sld [smem:[#allocation0]]
  $region62: #{forward.3} parent=0
    _
  %s14 = ssub.s32 1, %s12
  %s15 = scalar_select 0, %s14, %s12
  $region1: #{forward.3} parent=0
    #allocation2 [shape = 'u8[196608]{0}', space=vmem, size = 0x30000, scoped, tag = 'input window, operand 2, single buffered']
    #allocation3 [shape = 's32[1]{0}', space=sflag, size = 0x4, scoped, tag = 'scoped memory for forward.3']
    #allocation4 [shape = 'u8[32768]{0}', space=vmem, size = 0x8000, scoped, tag = 'input window, operand 4, single buffered']
    #allocation5 [shape = 's32[1]{0}', space=sflag, size = 0x4, scoped, tag = 'scoped memory for forward.3']
    %16 = vsyncpa [#allocation3], 0
    %17 = vsyncpa [#allocation5], 0
    // Predicated region
    $region2: #{forward.3} parent=1 // pred_check
      _
    $region3: #{forward.3} parent=1 // pred_check_branch
      %19 = sbr.rel (0) target = $region5
    $region4: #{forward.3} parent=1 // pred_region
      _
    $region5: #{forward.3} parent=1 // pred_fallthru
      _
    // Predicated region
    $region6: #{forward.3} parent=1 // pred_check
      _
    $region7: #{forward.3} parent=1 // pred_check_branch
      %21 = sbr.rel (0) target = $region9
    $region8: #{forward.3} parent=1 // pred_region
      _
    $region9: #{forward.3} parent=1 // pred_fallthru
      _
    // Predicated region
    $region10: #{forward.3} parent=1 // pred_check
      _
    $region11: #{forward.3} parent=1 // pred_check_branch
      %23 = sbr.rel (0) target = $region13
    $region12: #{forward.3} parent=1 // pred_region
      %25 = vsyncadd [#allocation3], 0
      %s26 = sshll.u32 %s2, 4
      %s27 = int_to_ptr.hbm [resolvable:$true] %s26
      %s28 = sshll.u32 [#allocation2], 4
      %s29 = int_to_ptr.vmem [resolvable:$true] %s28
      %34 = dma.hbm_to_vmem [thread:$0]  %s27, 6144, %s29, [#allocation3], 64, 64, 4
    $region13: #{forward.3} parent=1 // pred_fallthru
      _
    // Predicated region
    $region14: #{forward.3} parent=1 // pred_check
      _
    $region15: #{forward.3} parent=1 // pred_check_branch
      %36 = sbr.rel (0) target = $region17
    $region16: #{forward.3} parent=1 // pred_region
      _
    $region17: #{forward.3} parent=1 // pred_fallthru
      _
    // Predicated region
    $region18: #{forward.3} parent=1 // pred_check
      _
    $region19: #{forward.3} parent=1 // pred_check_branch
      %38 = sbr.rel (0) target = $region21
    $region20: #{forward.3} parent=1 // pred_region
      %40 = vsyncadd [#allocation5], 0
      %s41 = sshll.u32 %s4, 4
      %s42 = int_to_ptr.hbm [resolvable:$true] %s41
      %s43 = sshll.u32 [#allocation4], 4
      %s44 = int_to_ptr.vmem [resolvable:$true] %s43
      %49 = dma.hbm_to_vmem [thread:$0]  %s42, 1024, %s44, [#allocation5], 64, 64, 4
    $region21: #{forward.3} parent=1 // pred_fallthru
      _
    // Predicated region
    $region22: #{forward.3} parent=1 // pred_check
      _
    $region23: #{forward.3} parent=1 // pred_check_branch
      %51 = sbr.rel (0) target = $region25
    $region24: #{forward.3} parent=1 // pred_region
      _
    $region25: #{forward.3} parent=1 // pred_fallthru
      _
    // Predicated region
    $region26: #{forward.3} parent=1 // pred_check
      _
    $region27: #{forward.3} parent=1 // pred_check_branch
      %53 = sbr.rel (0) target = $region29
    $region28: #{forward.3} parent=1 // pred_region
      _
    $region29: #{forward.3} parent=1 // pred_fallthru
      _
    // Predicated region
    $region30: #{forward.3} parent=1 // pred_check
      _
    $region31: #{forward.3} parent=1 // pred_check_branch
      %55 = sbr.rel (0) target = $region33
    $region32: #{forward.3} parent=1 // pred_region
      _
    $region33: #{forward.3} parent=1 // pred_fallthru
      _
    // Predicated region
    $region34: #{forward.3} parent=1 // pred_check
      _
    $region35: #{forward.3} parent=1 // pred_check_branch
      %57 = sbr.rel (0) target = $region37
    $region36: #{forward.3} parent=1 // pred_region
      _
    $region37: #{forward.3} parent=1 // pred_fallthru
      _
    // Predicated region
    $region38: #{forward.3} parent=1 // pred_check
      _
    $region39: #{forward.3} parent=1 // pred_check_branch
      %59 = sbr.rel (0) target = $region41
    $region40: #{forward.3} parent=1 // pred_region
      _
    $region41: #{forward.3} parent=1 // pred_fallthru
      _
    // Predicated region
    $region42: #{forward.3} parent=1 // pred_check
      _
    $region43: #{forward.3} parent=1 // pred_check_branch
      %61 = sbr.rel (0) target = $region45
    $region44: #{forward.3} parent=1 // pred_region
      _
    $region45: #{forward.3} parent=1 // pred_fallthru
      _
    // Predicated region
    $region46: #{forward.3} parent=1 // pred_check
      _
    $region47: #{forward.3} parent=1 // pred_check_branch
      %63 = sbr.rel (0) target = $region49
    $region48: #{forward.3} parent=1 // pred_region
      %65 = dma.done [#allocation3], 6144
    $region49: #{forward.3} parent=1 // pred_fallthru
      _
    // Predicated region
    $region50: #{forward.3} parent=1 // pred_check
      _
    $region51: #{forward.3} parent=1 // pred_check_branch
      %67 = sbr.rel (0) target = $region53
    $region52: #{forward.3} parent=1 // pred_region
      %69 = dma.done [#allocation5], 1024
    $region53: #{forward.3} parent=1 // pred_fallthru
      _
    %v70 = vld [vmem:[%s0] sm:$0xff]
    %v71 = vld [vmem:[%s0 + $0x8] sm:$0xff]
    %v72 = vld [vmem:[%s0 + $0x10] sm:$0xff]
    %v73 = vld [vmem:[%s0 + $0x18] sm:$0xff]
    %v74 = vld [vmem:[%s0 + $0x20] sm:$0xff]
    %v75 = vld [vmem:[%s0 + $0x28] sm:$0xff]
    %v76 = vld [vmem:[#allocation2] sm:$0xf]
    %v77 = vld [vmem:[#allocation2 + $0x4] sm:$0xf]
    %v78 = vld [vmem:[#allocation2 + $0x8] sm:$0xf]
    %v79 = vld [vmem:[#allocation2 + $0xc] sm:$0xf]
    %v80 = vld [vmem:[#allocation2 + $0x10] sm:$0xf]
    %v81 = vld [vmem:[#allocation2 + $0x14] sm:$0xf]
    %v82 = vld [vmem:[#allocation2 + $0x18] sm:$0xf]
    %v83 = vld [vmem:[#allocation2 + $0x1c] sm:$0xf]
    %v84 = vld [vmem:[#allocation2 + $0x20] sm:$0xf]
    %v85 = vld [vmem:[#allocation2 + $0x24] sm:$0xf]
    %v86 = vld [vmem:[#allocation2 + $0x28] sm:$0xf]
    %v87 = vld [vmem:[#allocation2 + $0x2c] sm:$0xf]
    %v88 = vld [vmem:[#allocation2 + $0x30] sm:$0xf]
    %v89 = vld [vmem:[#allocation2 + $0x34] sm:$0xf]
    %v90 = vld [vmem:[#allocation2 + $0x38] sm:$0xf]
    %v91 = vld [vmem:[#allocation2 + $0x3c] sm:$0xf]
    %v92 = vld [vmem:[#allocation2 + $0x40] sm:$0xf]
    %v93 = vld [vmem:[#allocation2 + $0x44] sm:$0xf]
    %v94 = vld [vmem:[#allocation2 + $0x48] sm:$0xf]
    %v95 = vld [vmem:[#allocation2 + $0x4c] sm:$0xf]
    %v96 = vld [vmem:[#allocation2 + $0x50] sm:$0xf]
    %v97 = vld [vmem:[#allocation2 + $0x54] sm:$0xf]
    %v98 = vld [vmem:[#allocation2 + $0x58] sm:$0xf]
    %v99 = vld [vmem:[#allocation2 + $0x5c] sm:$0xf]
    %v100 = vld [vmem:[#allocation2 + $0x60] sm:$0xf]
    %v101 = vld [vmem:[#allocation2 + $0x64] sm:$0xf]
    %v102 = vld [vmem:[#allocation2 + $0x68] sm:$0xf]
    %v103 = vld [vmem:[#allocation2 + $0x6c] sm:$0xf]
    %v104 = vld [vmem:[#allocation2 + $0x70] sm:$0xf]
    %v105 = vld [vmem:[#allocation2 + $0x74] sm:$0xf]
    %v106 = vld [vmem:[#allocation2 + $0x78] sm:$0xf]
    %v107 = vld [vmem:[#allocation2 + $0x7c] sm:$0xf]
    %v108 = vld [vmem:[#allocation2 + $0x80] sm:$0xf]
    %v109 = vld [vmem:[#allocation2 + $0x84] sm:$0xf]
    %v110 = vld [vmem:[#allocation2 + $0x88] sm:$0xf]
    %v111 = vld [vmem:[#allocation2 + $0x8c] sm:$0xf]
    %v112 = vld [vmem:[#allocation2 + $0x90] sm:$0xf]
    %v113 = vld [vmem:[#allocation2 + $0x94] sm:$0xf]
    %v114 = vld [vmem:[#allocation2 + $0x98] sm:$0xf]
    %v115 = vld [vmem:[#allocation2 + $0x9c] sm:$0xf]
    %v116 = vld [vmem:[#allocation2 + $0xa0] sm:$0xf]
    %v117 = vld [vmem:[#allocation2 + $0xa4] sm:$0xf]
    %v118 = vld [vmem:[#allocation2 + $0xa8] sm:$0xf]
    %v119 = vld [vmem:[#allocation2 + $0xac] sm:$0xf]
    %v120 = vld [vmem:[#allocation2 + $0xb0] sm:$0xf]
    %v121 = vld [vmem:[#allocation2 + $0xb4] sm:$0xf]
    %v122 = vld [vmem:[#allocation2 + $0xb8] sm:$0xf]
    %v123 = vld [vmem:[#allocation2 + $0xbc] sm:$0xf]
    %v124 = vld [vmem:[#allocation2 + $0xc0] sm:$0xf]
    %v125 = vld [vmem:[#allocation2 + $0xc4] sm:$0xf]
    %v126 = vld [vmem:[#allocation2 + $0xc8] sm:$0xf]
    %v127 = vld [vmem:[#allocation2 + $0xcc] sm:$0xf]
    %v128 = vld [vmem:[#allocation2 + $0xd0] sm:$0xf]
    %v129 = vld [vmem:[#allocation2 + $0xd4] sm:$0xf]
    %v130 = vld [vmem:[#allocation2 + $0xd8] sm:$0xf]
    %v131 = vld [vmem:[#allocation2 + $0xdc] sm:$0xf]
    %v132 = vld [vmem:[#allocation2 + $0xe0] sm:$0xf]
    %v133 = vld [vmem:[#allocation2 + $0xe4] sm:$0xf]
    %v134 = vld [vmem:[#allocation2 + $0xe8] sm:$0xf]
    %v135 = vld [vmem:[#allocation2 + $0xec] sm:$0xf]
    %v136 = vld [vmem:[#allocation2 + $0xf0] sm:$0xf]
    %v137 = vld [vmem:[#allocation2 + $0xf4] sm:$0xf]
    %v138 = vld [vmem:[#allocation2 + $0xf8] sm:$0xf]
    %v139 = vld [vmem:[#allocation2 + $0xfc] sm:$0xf]
    %v140 = vld [vmem:[#allocation2 + $0x100] sm:$0xf]
    %v141 = vld [vmem:[#allocation2 + $0x104] sm:$0xf]
    %v142 = vld [vmem:[#allocation2 + $0x108] sm:$0xf]
    %v143 = vld [vmem:[#allocation2 + $0x10c] sm:$0xf]
    %v144 = vld [vmem:[#allocation2 + $0x110] sm:$0xf]
    %v145 = vld [vmem:[#allocation2 + $0x114] sm:$0xf]
    %v146 = vld [vmem:[#allocation2 + $0x118] sm:$0xf]
    %v147 = vld [vmem:[#allocation2 + $0x11c] sm:$0xf]
    %v148 = vld [vmem:[#allocation2 + $0x120] sm:$0xf]
    %v149 = vld [vmem:[#allocation2 + $0x124] sm:$0xf]
    %v150 = vld [vmem:[#allocation2 + $0x128] sm:$0xf]
    %v151 = vld [vmem:[#allocation2 + $0x12c] sm:$0xf]
    %v152 = vld [vmem:[#allocation2 + $0x130] sm:$0xf]
    %v153 = vld [vmem:[#allocation2 + $0x134] sm:$0xf]
    %v154 = vld [vmem:[#allocation2 + $0x138] sm:$0xf]
    %v155 = vld [vmem:[#allocation2 + $0x13c] sm:$0xf]
    %v156 = vld [vmem:[#allocation2 + $0x140] sm:$0xf]
    %v157 = vld [vmem:[#allocation2 + $0x144] sm:$0xf]
    %v158 = vld [vmem:[#allocation2 + $0x148] sm:$0xf]
    %v159 = vld [vmem:[#allocation2 + $0x14c] sm:$0xf]
    %v160 = vld [vmem:[#allocation2 + $0x150] sm:$0xf]
    %v161 = vld [vmem:[#allocation2 + $0x154] sm:$0xf]
    %v162 = vld [vmem:[#allocation2 + $0x158] sm:$0xf]
    %v163 = vld [vmem:[#allocation2 + $0x15c] sm:$0xf]
    %v164 = vld [vmem:[#allocation2 + $0x160] sm:$0xf]
    %v165 = vld [vmem:[#allocation2 + $0x164] sm:$0xf]
    %v166 = vld [vmem:[#allocation2 + $0x168] sm:$0xf]
    %v167 = vld [vmem:[#allocation2 + $0x16c] sm:$0xf]
    %v168 = vld [vmem:[#allocation2 + $0x170] sm:$0xf]
    %v169 = vld [vmem:[#allocation2 + $0x174] sm:$0xf]
    %v170 = vld [vmem:[#allocation2 + $0x178] sm:$0xf]
    %v171 = vld [vmem:[#allocation2 + $0x17c] sm:$0xf]
    %v172 = vld [vmem:[%s3] sm:$0x1]
    %v174 = vperm.slane %v172, 0
    %v182 = vunpack.c.l.b16 %v70
    %v183 = vunpack.c.h.b16 %v70
    %v184 = vunpack.c.l.b16 %v71
    %v185 = vunpack.c.h.b16 %v71
    %v186 = vunpack.c.l.b16 %v72
    %v187 = vunpack.c.h.b16 %v72
    %v188 = vunpack.c.l.b16 %v73
    %v189 = vunpack.c.h.b16 %v73
    %v190 = vunpack.c.l.b16 %v74
    %v191 = vunpack.c.h.b16 %v74
    %v192 = vunpack.c.l.b16 %v75
    %v193 = vunpack.c.h.b16 %v75
    %v194 = vpack.c.b16 %v188, %v182
    %v195 = vpack.c.b16 %v189, %v183
    %v196 = vpack.c.b16 %v190, %v184
    %v197 = vpack.c.b16 %v191, %v185
    %v198 = vpack.c.b16 %v192, %v186
    %v199 = vpack.c.b16 %v193, %v187
    %v302 = vunpack.c.l.b16 %v76
    %v303 = vunpack.c.l.b16 %v77
    %v304 = vunpack.c.l.b16 %v78
    %v305 = vunpack.c.l.b16 %v79
    %v306 = vunpack.c.l.b16 %v80
    %v307 = vunpack.c.l.b16 %v81
    %v308 = vunpack.c.l.b16 %v82
    %v309 = vunpack.c.l.b16 %v83
    %v310 = vunpack.c.l.b16 %v84
    %v311 = vunpack.c.l.b16 %v85
    %v312 = vunpack.c.l.b16 %v86
    %v313 = vunpack.c.l.b16 %v87
    %v314 = vunpack.c.l.b16 %v88
    %v315 = vunpack.c.l.b16 %v89
    %v316 = vunpack.c.l.b16 %v90
    %v317 = vunpack.c.l.b16 %v91
    %v318 = vunpack.c.l.b16 %v92
    %v319 = vunpack.c.l.b16 %v93
    %v320 = vunpack.c.l.b16 %v94
    %v321 = vunpack.c.l.b16 %v95
    %v322 = vunpack.c.l.b16 %v96
    %v323 = vunpack.c.l.b16 %v97
    %v324 = vunpack.c.l.b16 %v98
    %v325 = vunpack.c.l.b16 %v99
    %v326 = vunpack.c.l.b16 %v100
    %v327 = vunpack.c.l.b16 %v101
    %v328 = vunpack.c.l.b16 %v102
    %v329 = vunpack.c.l.b16 %v103
    %v330 = vunpack.c.l.b16 %v104
    %v331 = vunpack.c.l.b16 %v105
    %v332 = vunpack.c.l.b16 %v106
    %v333 = vunpack.c.l.b16 %v107
    %v334 = vunpack.c.l.b16 %v108
    %v335 = vunpack.c.l.b16 %v109
    %v336 = vunpack.c.l.b16 %v110
    %v337 = vunpack.c.l.b16 %v111
    %v338 = vunpack.c.l.b16 %v112
    %v339 = vunpack.c.l.b16 %v113
    %v340 = vunpack.c.l.b16 %v114
    %v341 = vunpack.c.l.b16 %v115
    %v342 = vunpack.c.l.b16 %v116
    %v343 = vunpack.c.l.b16 %v117
    %v344 = vunpack.c.l.b16 %v118
    %v345 = vunpack.c.l.b16 %v119
    %v346 = vunpack.c.l.b16 %v120
    %v347 = vunpack.c.l.b16 %v121
    %v348 = vunpack.c.l.b16 %v122
    %v349 = vunpack.c.l.b16 %v123
    %v350 = vunpack.c.l.b16 %v124
    %v351 = vunpack.c.l.b16 %v125
    %v352 = vunpack.c.l.b16 %v126
    %v353 = vunpack.c.l.b16 %v127
    %v354 = vunpack.c.l.b16 %v128
    %v355 = vunpack.c.l.b16 %v129
    %v356 = vunpack.c.l.b16 %v130
    %v357 = vunpack.c.l.b16 %v131
    %v358 = vunpack.c.l.b16 %v132
    %v359 = vunpack.c.l.b16 %v133
    %v360 = vunpack.c.l.b16 %v134
    %v361 = vunpack.c.l.b16 %v135
    %v362 = vunpack.c.l.b16 %v136
    %v363 = vunpack.c.l.b16 %v137
    %v364 = vunpack.c.l.b16 %v138
    %v365 = vunpack.c.l.b16 %v139
    %v366 = vunpack.c.l.b16 %v140
    %v367 = vunpack.c.l.b16 %v141
    %v368 = vunpack.c.l.b16 %v142
    %v369 = vunpack.c.l.b16 %v143
    %v370 = vunpack.c.l.b16 %v144
    %v371 = vunpack.c.l.b16 %v145
    %v372 = vunpack.c.l.b16 %v146
    %v373 = vunpack.c.l.b16 %v147
    %v374 = vunpack.c.l.b16 %v148
    %v375 = vunpack.c.l.b16 %v149
    %v376 = vunpack.c.l.b16 %v150
    %v377 = vunpack.c.l.b16 %v151
    %v378 = vunpack.c.l.b16 %v152
    %v379 = vunpack.c.l.b16 %v153
    %v380 = vunpack.c.l.b16 %v154
    %v381 = vunpack.c.l.b16 %v155
    %v382 = vunpack.c.l.b16 %v156
    %v383 = vunpack.c.l.b16 %v157
    %v384 = vunpack.c.l.b16 %v158
    %v385 = vunpack.c.l.b16 %v159
    %v386 = vunpack.c.l.b16 %v160
    %v387 = vunpack.c.l.b16 %v161
    %v388 = vunpack.c.l.b16 %v162
    %v389 = vunpack.c.l.b16 %v163
    %v390 = vunpack.c.l.b16 %v164
    %v391 = vunpack.c.l.b16 %v165
    %v392 = vunpack.c.l.b16 %v166
    %v393 = vunpack.c.l.b16 %v167
    %v394 = vunpack.c.l.b16 %v168
    %v395 = vunpack.c.l.b16 %v169
    %v396 = vunpack.c.l.b16 %v170
    %v397 = vunpack.c.l.b16 %v171
    %v398 = vpack.c.b16 %v303, %v302
    %v399 = vpack.c.b16 %v305, %v304
    %v400 = vpack.c.b16 %v307, %v306
    %v401 = vpack.c.b16 %v309, %v308
    %v402 = vpack.c.b16 %v311, %v310
    %v403 = vpack.c.b16 %v313, %v312
    %v404 = vpack.c.b16 %v315, %v314
    %v405 = vpack.c.b16 %v317, %v316
    %v406 = vpack.c.b16 %v319, %v318
    %v407 = vpack.c.b16 %v321, %v320
    %v408 = vpack.c.b16 %v323, %v322
    %v409 = vpack.c.b16 %v325, %v324
    %v410 = vpack.c.b16 %v327, %v326
    %v411 = vpack.c.b16 %v329, %v328
    %v412 = vpack.c.b16 %v331, %v330
    %v413 = vpack.c.b16 %v333, %v332
    %v414 = vpack.c.b16 %v335, %v334
    %v415 = vpack.c.b16 %v337, %v336
    %v416 = vpack.c.b16 %v339, %v338
    %v417 = vpack.c.b16 %v341, %v340
    %v418 = vpack.c.b16 %v343, %v342
    %v419 = vpack.c.b16 %v345, %v344
    %v420 = vpack.c.b16 %v347, %v346
    %v421 = vpack.c.b16 %v349, %v348
    %v422 = vpack.c.b16 %v351, %v350
    %v423 = vpack.c.b16 %v353, %v352
    %v424 = vpack.c.b16 %v355, %v354
    %v425 = vpack.c.b16 %v357, %v356
    %v426 = vpack.c.b16 %v359, %v358
    %v427 = vpack.c.b16 %v361, %v360
    %v428 = vpack.c.b16 %v363, %v362
    %v429 = vpack.c.b16 %v365, %v364
    %v430 = vpack.c.b16 %v367, %v366
    %v431 = vpack.c.b16 %v369, %v368
    %v432 = vpack.c.b16 %v371, %v370
    %v433 = vpack.c.b16 %v373, %v372
    %v434 = vpack.c.b16 %v375, %v374
    %v435 = vpack.c.b16 %v377, %v376
    %v436 = vpack.c.b16 %v379, %v378
    %v437 = vpack.c.b16 %v381, %v380
    %v438 = vpack.c.b16 %v383, %v382
    %v439 = vpack.c.b16 %v385, %v384
    %v440 = vpack.c.b16 %v387, %v386
    %v441 = vpack.c.b16 %v389, %v388
    %v442 = vpack.c.b16 %v391, %v390
    %v443 = vpack.c.b16 %v393, %v392
    %v444 = vpack.c.b16 %v395, %v394
    %v445 = vpack.c.b16 %v397, %v396
    %494 = vmatpush.bf16.msra.mxu0 %v405
    %495 = vmatpush.bf16.msra.mxu0 %v404
    %496 = vmatpush.bf16.msra.mxu0 %v403
    %497 = vmatpush.bf16.msra.mxu0 %v402
    %498 = vmatpush.bf16.msra.mxu0 %v401
    %499 = vmatpush.bf16.msra.mxu0 %v400
    %500 = vmatpush.bf16.msra.mxu0 %v399
    %501 = vmatpush.bf16.msra.mxu0 %v398
    %502 = vmatmul.bf16.gmra.mxu0 %v194
    %v503 = vpop.f32.mrf.mxu0
    %v504 = vadd.f32 %v174, %v503
    %v505 = vpop.f32.mrf.mxu0
    %v506 = vadd.f32 %v174, %v505
    %507 = vdwg.mxu0
    %508 = vmatpush.bf16.msra.mxu0 %v413
    %509 = vmatpush.bf16.msra.mxu0 %v412
    %510 = vmatpush.bf16.msra.mxu0 %v411
    %511 = vmatpush.bf16.msra.mxu0 %v410
    %512 = vmatpush.bf16.msra.mxu0 %v409
    %513 = vmatpush.bf16.msra.mxu0 %v408
    %514 = vmatpush.bf16.msra.mxu0 %v407
    %515 = vmatpush.bf16.msra.mxu0 %v406
    %516 = vmatmul.bf16.gmra.mxu0 %v195
    %v517 = vpop.f32.mrf.mxu0
    %v518 = vadd.f32 %v504, %v517
    %v519 = vpop.f32.mrf.mxu0
    %v520 = vadd.f32 %v506, %v519
    %521 = vdwg.mxu0
    %522 = vmatpush.bf16.msra.mxu0 %v421
    %523 = vmatpush.bf16.msra.mxu0 %v420
    %524 = vmatpush.bf16.msra.mxu0 %v419
    %525 = vmatpush.bf16.msra.mxu0 %v418
    %526 = vmatpush.bf16.msra.mxu0 %v417
    %527 = vmatpush.bf16.msra.mxu0 %v416
    %528 = vmatpush.bf16.msra.mxu0 %v415
    %529 = vmatpush.bf16.msra.mxu0 %v414
    %530 = vmatmul.bf16.gmra.mxu0 %v196
    %v531 = vpop.f32.mrf.mxu0
    %v532 = vadd.f32 %v518, %v531
    %v533 = vpop.f32.mrf.mxu0
    %v534 = vadd.f32 %v520, %v533
    %535 = vdwg.mxu0
    %536 = vmatpush.bf16.msra.mxu0 %v429
    %537 = vmatpush.bf16.msra.mxu0 %v428
    %538 = vmatpush.bf16.msra.mxu0 %v427
    %539 = vmatpush.bf16.msra.mxu0 %v426
    %540 = vmatpush.bf16.msra.mxu0 %v425
    %541 = vmatpush.bf16.msra.mxu0 %v424
    %542 = vmatpush.bf16.msra.mxu0 %v423
    %543 = vmatpush.bf16.msra.mxu0 %v422
    %544 = vmatmul.bf16.gmra.mxu0 %v197
    %v545 = vpop.f32.mrf.mxu0
    %v546 = vadd.f32 %v532, %v545
    %v547 = vpop.f32.mrf.mxu0
    %v548 = vadd.f32 %v534, %v547
    %549 = vdwg.mxu0
    %550 = vmatpush.bf16.msra.mxu0 %v437
    %551 = vmatpush.bf16.msra.mxu0 %v436
    %552 = vmatpush.bf16.msra.mxu0 %v435
    %553 = vmatpush.bf16.msra.mxu0 %v434
    %554 = vmatpush.bf16.msra.mxu0 %v433
    %555 = vmatpush.bf16.msra.mxu0 %v432
    %556 = vmatpush.bf16.msra.mxu0 %v431
    %557 = vmatpush.bf16.msra.mxu0 %v430
    %558 = vmatmul.bf16.gmra.mxu0 %v198
    %v559 = vpop.f32.mrf.mxu0
    %v560 = vadd.f32 %v546, %v559
    %v561 = vpop.f32.mrf.mxu0
    %v562 = vadd.f32 %v548, %v561
    %563 = vdwg.mxu0
    %564 = vmatpush.bf16.msra.mxu0 %v445
    %565 = vmatpush.bf16.msra.mxu0 %v444
    %566 = vmatpush.bf16.msra.mxu0 %v443
    %567 = vmatpush.bf16.msra.mxu0 %v442
    %568 = vmatpush.bf16.msra.mxu0 %v441
    %569 = vmatpush.bf16.msra.mxu0 %v440
    %570 = vmatpush.bf16.msra.mxu0 %v439
    %571 = vmatpush.bf16.msra.mxu0 %v438
    %572 = vmatmul.bf16.gmra.mxu0 %v199
    %v573 = vpop.f32.mrf.mxu0
    %v574 = vadd.f32 %v560, %v573
    %v575 = vpop.f32.mrf.mxu0
    %v576 = vadd.f32 %v562, %v575
    %577 = vdwg.mxu0
    %v578 = vmax.f32 %v574, 0.0
    %v579 = vmax.f32 %v576, 0.0
    %v580 = vpack.c.bf16 %v579, %v578
    %v581 = vld [vmem:[#allocation4] sm:$0xf]
    %v582 = vld [vmem:[#allocation4 + $0x4] sm:$0xf]
    %v583 = vld [vmem:[#allocation4 + $0x8] sm:$0xf]
    %v584 = vld [vmem:[#allocation4 + $0xc] sm:$0xf]
    %v585 = vld [vmem:[#allocation4 + $0x10] sm:$0xf]
    %v586 = vld [vmem:[#allocation4 + $0x14] sm:$0xf]
    %v587 = vld [vmem:[#allocation4 + $0x18] sm:$0xf]
    %v588 = vld [vmem:[#allocation4 + $0x1c] sm:$0xf]
    %v589 = vld [vmem:[#allocation4 + $0x20] sm:$0xf]
    %v590 = vld [vmem:[#allocation4 + $0x24] sm:$0xf]
    %v591 = vld [vmem:[#allocation4 + $0x28] sm:$0xf]
    %v592 = vld [vmem:[#allocation4 + $0x2c] sm:$0xf]
    %v593 = vld [vmem:[#allocation4 + $0x30] sm:$0xf]
    %v594 = vld [vmem:[#allocation4 + $0x34] sm:$0xf]
    %v595 = vld [vmem:[#allocation4 + $0x38] sm:$0xf]
    %v596 = vld [vmem:[#allocation4 + $0x3c] sm:$0xf]
    %v597 = vld [vmem:[%s1] sm:$0x1]
    %v598 = vpack.c.bf16 %v597, %v597
    %v599 = vld [vmem:[%s5] sm:$0xf]
    %v600 = vld [vmem:[%s5 + $0x4] sm:$0xf]
    %v601 = vld [vmem:[%s5 + $0x8] sm:$0xf]
    %v602 = vld [vmem:[%s5 + $0xc] sm:$0xf]
    %v603 = vld [vmem:[%s5 + $0x10] sm:$0xf]
    %v604 = vld [vmem:[%s5 + $0x14] sm:$0xf]
    %v605 = vld [vmem:[%s5 + $0x18] sm:$0xf]
    %v606 = vld [vmem:[%s5 + $0x1c] sm:$0xf]
    %v607 = vld [vmem:[%s5 + $0x20] sm:$0xf]
    %v608 = vld [vmem:[%s5 + $0x24] sm:$0xf]
    %v609 = vld [vmem:[%s5 + $0x28] sm:$0xf]
    %v610 = vld [vmem:[%s5 + $0x2c] sm:$0xf]
    %v611 = vld [vmem:[%s5 + $0x30] sm:$0xf]
    %v612 = vld [vmem:[%s5 + $0x34] sm:$0xf]
    %v613 = vld [vmem:[%s5 + $0x38] sm:$0xf]
    %v614 = vld [vmem:[%s5 + $0x3c] sm:$0xf]
    %v631 = vunpack.c.l.b16 %v599
    %v632 = vunpack.c.l.b16 %v600
    %v633 = vunpack.c.l.b16 %v601
    %v634 = vunpack.c.l.b16 %v602
    %v635 = vunpack.c.l.b16 %v603
    %v636 = vunpack.c.l.b16 %v604
    %v637 = vunpack.c.l.b16 %v605
    %v638 = vunpack.c.l.b16 %v606
    %v639 = vunpack.c.l.b16 %v607
    %v640 = vunpack.c.l.b16 %v608
    %v641 = vunpack.c.l.b16 %v609
    %v642 = vunpack.c.l.b16 %v610
    %v643 = vunpack.c.l.b16 %v611
    %v644 = vunpack.c.l.b16 %v612
    %v645 = vunpack.c.l.b16 %v613
    %v646 = vunpack.c.l.b16 %v614
    %v647 = vpack.c.b16 %v632, %v631
    %v648 = vpack.c.b16 %v634, %v633
    %v649 = vpack.c.b16 %v636, %v635
    %v650 = vpack.c.b16 %v638, %v637
    %v651 = vpack.c.b16 %v640, %v639
    %v652 = vpack.c.b16 %v642, %v641
    %v653 = vpack.c.b16 %v644, %v643
    %v654 = vpack.c.b16 %v646, %v645
    %663 = vmatpush.bf16.msra.mxu0 %v654
    %664 = vmatpush.bf16.msra.mxu0 %v653
    %665 = vmatpush.bf16.msra.mxu0 %v652
    %666 = vmatpush.bf16.msra.mxu0 %v651
    %667 = vmatpush.bf16.msra.mxu0 %v650
    %668 = vmatpush.bf16.msra.mxu0 %v649
    %669 = vmatpush.bf16.msra.mxu0 %v648
    %670 = vmatpush.bf16.msra.mxu0 %v647
    %671 = vmatmul.bf16.gmra.mxu0 %v598
    %v672 = vpop.f32.mrf.mxu0
    %v673 = vadd.f32 0.0, %v672
    %v674 = vpop.f32.mrf.mxu0
    %675 = vdwg.mxu0
    %v676 = vperm.slane %v673, 0
    %v693 = vunpack.c.l.b16 %v581
    %v694 = vunpack.c.l.b16 %v582
    %v695 = vunpack.c.l.b16 %v583
    %v696 = vunpack.c.l.b16 %v584
    %v697 = vunpack.c.l.b16 %v585
    %v698 = vunpack.c.l.b16 %v586
    %v699 = vunpack.c.l.b16 %v587
    %v700 = vunpack.c.l.b16 %v588
    %v701 = vunpack.c.l.b16 %v589
    %v702 = vunpack.c.l.b16 %v590
    %v703 = vunpack.c.l.b16 %v591
    %v704 = vunpack.c.l.b16 %v592
    %v705 = vunpack.c.l.b16 %v593
    %v706 = vunpack.c.l.b16 %v594
    %v707 = vunpack.c.l.b16 %v595
    %v708 = vunpack.c.l.b16 %v596
    %v709 = vpack.c.b16 %v694, %v693
    %v710 = vpack.c.b16 %v696, %v695
    %v711 = vpack.c.b16 %v698, %v697
    %v712 = vpack.c.b16 %v700, %v699
    %v713 = vpack.c.b16 %v702, %v701
    %v714 = vpack.c.b16 %v704, %v703
    %v715 = vpack.c.b16 %v706, %v705
    %v716 = vpack.c.b16 %v708, %v707
    %725 = vmatpush.bf16.msra.mxu0 %v716
    %726 = vmatpush.bf16.msra.mxu0 %v715
    %727 = vmatpush.bf16.msra.mxu0 %v714
    %728 = vmatpush.bf16.msra.mxu0 %v713
    %729 = vmatpush.bf16.msra.mxu0 %v712
    %730 = vmatpush.bf16.msra.mxu0 %v711
    %731 = vmatpush.bf16.msra.mxu0 %v710
    %732 = vmatpush.bf16.msra.mxu0 %v709
    %733 = vmatmul.bf16.gmra.mxu0 %v580
    %v734 = vpop.f32.mrf.mxu0
    %v735 = vadd.f32 %v676, %v734
    %v736 = vpop.f32.mrf.mxu0
    %v737 = vadd.f32 %v676, %v736
    %738 = vdwg.mxu0
    %v739 = vld [vmem:[%s6] sm:$0x1]
    %v741 = vperm.slane %v739, 0
    %v743 = vadd.f32 %v735, %v741
    %v744 = vadd.f32 %v737, %v741
    %v745 = vmax.f32 %v743, 0.0
    %v746 = vmax.f32 %v744, 0.0
    %747 = vadd.xlane.f32.xlu0 %v745
    %v748 = vpop.xlane.xlu0 %747
    %749 = vadd.xlane.f32.xlu0 %v746
    %v750 = vpop.xlane.xlu0 %749
    %v751 = vmul.f32 %v748, 0.03125
    %v752 = vmul.f32 %v750, 0.03125
    %v753 = vlaneseq
    %v754 = vand.u32 %v753, 127
    %vm755 = vcmp.lt.s32.totalorder %v754, 32
    %v756 = vsel %vm755, 1, 0
    %v757 = vcvt.s32.f32 %v756
    %v758 = vsub.f32 %v745, %v751
    %v759 = vsub.f32 %v746, %v752
    %v760 = vmul.f32 %v758, %v757
    %v761 = vmul.f32 %v759, %v757
    %v762 = vmul.f32 %v760, %v760
    %v763 = vmul.f32 %v761, %v761
    %764 = vadd.xlane.f32.xlu0 %v762
    %v765 = vpop.xlane.xlu0 %764
    %766 = vadd.xlane.f32.xlu0 %v763
    %v767 = vpop.xlane.xlu0 %766
    %v768 = vmul.f32 %v765, 0.03125
    %v769 = vmul.f32 %v767, 0.03125
    %v770 = vadd.f32 %v768, 1e-05
    %v771 = vadd.f32 %v769, 1e-05
    %v772 = vrsqrt.pop %v770
    %v773 = vmul.f32 %v772, %v770
    %v774 = vmul.f32 %v773, %v772
    %v775 = vmul.f32 0.5, %v774
    %v776 = vsub.f32 1.5, %v775
    %v777 = vmul.f32 %v772, %v776
    %vm778 = vweird.f32 %v770
    %vm779 = vweird.f32 %v772
    %vm780 = vmor %vm778, %vm779
    %v781 = vsel %vm780, %v772, %v777
    %v782 = vrsqrt.pop %v771
    %v783 = vmul.f32 %v782, %v771
    %v784 = vmul.f32 %v783, %v782
    %v785 = vmul.f32 0.5, %v784
    %v786 = vsub.f32 1.5, %v785
    %v787 = vmul.f32 %v782, %v786
    %vm788 = vweird.f32 %v771
    %vm789 = vweird.f32 %v782
    %vm790 = vmor %vm788, %vm789
    %v791 = vsel %vm790, %v782, %v787
    %v792 = vld [vmem:[%s7] sm:$0x1]
    %v794 = vperm.slane %v792, 0
    %v796 = vmul.f32 %v781, %v794
    %v797 = vmul.f32 %v791, %v794
    %v798 = vmul.f32 %v760, %v796
    %v799 = vmul.f32 %v761, %v797
    %v800 = vld [vmem:[%s8] sm:$0x1]
    %v802 = vperm.slane %v800, 0
    %v804 = vadd.f32 %v798, %v802
    %v805 = vadd.f32 %v799, %v802
    %v806 = vpack.c.bf16 %v805, %v804
    %v807 = vld [vmem:[%s9] sm:$0xf]
    %v808 = vld [vmem:[%s9 + $0x4] sm:$0xf]
    %v809 = vld [vmem:[%s9 + $0x8] sm:$0xf]
    %v810 = vld [vmem:[%s9 + $0xc] sm:$0xf]
    %v811 = vld [vmem:[%s9 + $0x10] sm:$0xf]
    %v812 = vld [vmem:[%s9 + $0x14] sm:$0xf]
    %v813 = vld [vmem:[%s9 + $0x18] sm:$0xf]
    %v814 = vld [vmem:[%s9 + $0x1c] sm:$0xf]
    %v815 = vld [vmem:[%s9 + $0x20] sm:$0xf]
    %v816 = vld [vmem:[%s9 + $0x24] sm:$0xf]
    %v817 = vld [vmem:[%s9 + $0x28] sm:$0xf]
    %v818 = vld [vmem:[%s9 + $0x2c] sm:$0xf]
    %v819 = vld [vmem:[%s9 + $0x30] sm:$0xf]
    %v820 = vld [vmem:[%s9 + $0x34] sm:$0xf]
    %v821 = vld [vmem:[%s9 + $0x38] sm:$0xf]
    %v822 = vld [vmem:[%s9 + $0x3c] sm:$0xf]
    %v823 = vld [vmem:[%s10] sm:$0x1]
    %v825 = vperm.slane %v823, 0
    %v843 = vunpack.c.l.b16 %v807
    %v844 = vunpack.c.l.b16 %v808
    %v845 = vunpack.c.l.b16 %v809
    %v846 = vunpack.c.l.b16 %v810
    %v847 = vunpack.c.l.b16 %v811
    %v848 = vunpack.c.l.b16 %v812
    %v849 = vunpack.c.l.b16 %v813
    %v850 = vunpack.c.l.b16 %v814
    %v851 = vunpack.c.l.b16 %v815
    %v852 = vunpack.c.l.b16 %v816
    %v853 = vunpack.c.l.b16 %v817
    %v854 = vunpack.c.l.b16 %v818
    %v855 = vunpack.c.l.b16 %v819
    %v856 = vunpack.c.l.b16 %v820
    %v857 = vunpack.c.l.b16 %v821
    %v858 = vunpack.c.l.b16 %v822
    %v859 = vpack.c.b16 %v844, %v843
    %v860 = vpack.c.b16 %v846, %v845
    %v861 = vpack.c.b16 %v848, %v847
    %v862 = vpack.c.b16 %v850, %v849
    %v863 = vpack.c.b16 %v852, %v851
    %v864 = vpack.c.b16 %v854, %v853
    %v865 = vpack.c.b16 %v856, %v855
    %v866 = vpack.c.b16 %v858, %v857
    %875 = vmatpush.bf16.msra.mxu0 %v866
    %876 = vmatpush.bf16.msra.mxu0 %v865
    %877 = vmatpush.bf16.msra.mxu0 %v864
    %878 = vmatpush.bf16.msra.mxu0 %v863
    %879 = vmatpush.bf16.msra.mxu0 %v862
    %880 = vmatpush.bf16.msra.mxu0 %v861
    %881 = vmatpush.bf16.msra.mxu0 %v860
    %882 = vmatpush.bf16.msra.mxu0 %v859
    %883 = vmatmul.bf16.gmra.mxu0 %v806
    %v884 = vpop.f32.mrf.mxu0
    %v885 = vadd.f32 %v825, %v884
    %v886 = vpop.f32.mrf.mxu0
    %v887 = vadd.f32 %v825, %v886
    %888 = vdwg.mxu0
    %v889 = vpack.c.bf16 %v885, %v885
    %v890 = vpack.c.bf16 %v887, %v887
    %891 = vst [vmem:[%s11] sm:$0xf] %v889
    %892 = vst [vmem:[%s11 + $0x4] sm:$0xf] %v890
    // Predicated region
    $region54: #{forward.3} parent=1 // pred_check
      _
    $region55: #{forward.3} parent=1 // pred_check_branch
      %894 = sbr.rel (0) target = $region57
    $region56: #{forward.3} parent=1 // pred_region
      _
    $region57: #{forward.3} parent=1 // pred_fallthru
      _
    // Predicated region
    $region58: #{forward.3} parent=1 // pred_check
      _
    $region59: #{forward.3} parent=1 // pred_check_branch
      %896 = sbr.rel (0) target = $region61
    $region60: #{forward.3} parent=1 // pred_region
      _
    $region61: #{forward.3} parent=1 // pred_fallthru
      _
    %897 = vsyncpa [#allocation3], 1
    %898 = vsyncpa [#allocation5], 1

</llo_original>
